<compile_context>
chip_gen: v6e
topology: v6e:2x2x1
jax: 0.10.0
libtpu: 0.0.40
codegen_flags: <defaults>
</compile_context>

<pallas_src>
import functools

import jax
import jax.numpy as jnp
from jax.experimental import pallas as pl
from jax.experimental.pallas import tpu as pltpu


def _round_up(x, m):
    return (x + m - 1) // m * m


# ---------------------------------------------------------------------------
# Per-generation VMEM budget: ~3/4 of physical VMEM, capped at 100 MiB
# (v5e/v6e: 128 MiB -> ~96-100 MiB, v7x: 64 MiB -> 48 MiB, unknown -> 48 MiB).
# ---------------------------------------------------------------------------
def _vmem_budget_bytes():
    cap = 64 * 1024 * 1024
    try:
        cap = int(pltpu.get_tpu_info().vmem_capacity_bytes)
    except Exception:
        pass
    return int(min(cap * 3 // 4, 100 * 1024 * 1024))


_VMEM_BUDGET = _vmem_budget_bytes()

# Feature flags flipped off (sticky) if this jax/libtpu build rejects them.
_SINGLE_BUFFER_OK = [True]   # pl.Buffered(1) on grid-invariant blocks
_FATTEN_OK = [True]          # in-kernel lane concat for fat-K matmuls


# ---------------------------------------------------------------------------
# Pallas kernel: sum_i conv_KxK(x_i, w_i) + bias, optional ReLU / sigmoid.
# One (batch, row-tile) block per grid step.
# ---------------------------------------------------------------------------
def _conv_kernel(*refs, k, th, wp, n_in, act, off, fat, load_rows):
    # refs = x_0, w_0, ..., x_{n-1}, w_{n-1}, bias, out
    #   x_i : (1, Hp, Wp, Cin_i) bf16, full padded plane (resident in VMEM)
    #   w_i : (k, k, Cin_i, Cout) bf16, or (k, k*Cin_i, Cout) when fat[i]
    #   bias: (1, Cout) f32
    #   out : (1, th, Wp, Cout) -- full padded width; caller crops cols >= Wo.
    # `off` = plane_pad - conv_pad (row/col base offset into the padded plane)
    # so convs with different padding can share one padded plane.
    o_ref = refs[-1]
    bias_ref = refs[-2]
    cout = o_ref.shape[-1]
    r0 = pl.program_id(1) * th + off            # first padded row of this tile

    acc = None
    for i in range(n_in):
        x_ref = refs[2 * i]
        w_ref = refs[2 * i + 1]
        cin = x_ref.shape[-1]
        # Single flatten of the halo tile; Wp is a multiple of 8 so this is a
        # cheap leading-dim merge, not a per-tap relayout.
        xf = x_ref[0, pl.ds(r0, load_rows)].reshape(load_rows * wp, cin)
        if fat[i]:
            # K-fattening: per dy, lane-concat the k dx-shifted windows so the
            # MXU sees one (M, k*Cin) x (k*Cin, Cout) dot instead of k small ones.
            for dy in range(k):
                base = dy * wp + off
                win = jnp.concatenate(
                    [jax.lax.slice_in_dim(xf, base + dx, base + dx + th * wp,
                                          axis=0)
                     for dx in range(k)], axis=-1)
                c = jnp.dot(win, w_ref[dy], preferred_element_type=jnp.float32)
                acc = c if acc is None else acc + c
        else:
            for dy in range(k):
                for dx in range(k):
                    s = dy * wp + off + dx
                    win = jax.lax.slice_in_dim(xf, s, s + th * wp, axis=0)
                    c = jnp.dot(win, w_ref[dy, dx],
                                preferred_element_type=jnp.float32)
                    acc = c if acc is None else acc + c

    y = acc + bias_ref[...]                      # f32 epilogue
    if act == "relu":
        y = jnp.maximum(y, 0.0)
    elif act == "sigmoid":
        y = jax.nn.sigmoid(y)
    # Full-width, lane-dense store (no in-kernel crop -> no relayout, unmasked
    # vst).  Columns >= Wo hold flat-shift wrap-around garbage; the wrapper's
    # [:, :, :Wo] crop is mandatory.
    o_ref[0] = y.reshape(th, wp, cout).astype(o_ref.dtype)


def _pick_tile_h(ho, n_batch, wp, cout, cins, fats, k, out_bytes, resident_bytes):
    """Largest row tile whose per-step working set fits the VMEM budget after
    the resident planes/weights (fewer grid steps -> fewer RHS pushes and less
    per-step overhead)."""
    acc_row = 4 * wp * cout                            # f32 accumulator
    out_row = 2 * out_bytes * wp * cout                # double-buffered out block
    work_row = 0
    for cin, fat in zip(cins, fats):
        work_row += 2 * wp * cin * ((k if fat else 1) + 2)   # window/concat copies
    per_row = acc_row + out_row + work_row
    avail = _VMEM_BUDGET - resident_bytes - (2 << 20)        # scheduler headroom
    th_max = max(1, avail // per_row)
    if n_batch == 1 and ho >= 2:
        th_max = min(th_max, max(1, ho // 2))   # keep >=2 steps for dual-TC chips
    best = 1
    for d in range(1, ho + 1):
        if ho % d == 0 and d <= th_max:
            best = d
    return best


def _pad_plane(x, pad):
    """Zero-pad NHWC for the flat-shift conv kernel: H by (pad, pad+1) (one
    spare bottom row for the shifted flat taps), W by (pad, Wp-W-pad) with Wp a
    multiple of 8 (layout-friendly flatten)."""
    n, h, w, _ = x.shape
    wp = _round_up(w + 2 * pad, 8)
    xp = jnp.pad(x.astype(jnp.bfloat16),
                 ((0, 0), (pad, pad + 1), (pad, wp - w - pad), (0, 0)))
    return xp, dict(pad=pad, H=h, W=w, Wp=wp, Hp=h + 2 * pad + 1)


def _conv_call(planes, infos, weights, bias, *, k, conv_pad, act,
               out_dtype=jnp.bfloat16):
    """Conv over pre-padded planes (results summed over inputs), full padded
    width output.  Returns (y (N, Ho, Wp, Cout), Wo); caller crops [:, :, :Wo]."""
    info = infos[0]
    assert all(i == info for i in infos)
    H, W, Wp, Hp, P = info["H"], info["W"], info["Wp"], info["Hp"], info["pad"]
    off = P - conv_pad
    assert off >= 0
    Ho = H + 2 * conv_pad - k + 1
    Wo = W + 2 * conv_pad - k + 1
    N = planes[0].shape[0]
    Cout = weights[0].shape[-1]
    cins = [p.shape[-1] for p in planes]
    can_fat = (k > 1) and any(k * c <= 256 for c in cins)

    resident = 0
    for p, w in zip(planes, weights):
        resident += 2 * 2 * p.shape[1] * p.shape[2] * p.shape[3]   # 2 bufs, bf16
        resident += 2 * 2 * int(w.size)
    bias2d = bias.reshape(1, Cout).astype(jnp.float32)

    def run(single, fat_en):
        fats = tuple(fat_en and k > 1 and k * c <= 256 for c in cins)
        th = _pick_tile_h(Ho, N, Wp, Cout, cins, fats, k,
                          jnp.dtype(out_dtype).itemsize, resident)
        load_rows = th + k - 1 + (0 if (k == 1 and off == 0) else 1)

        def spec(shape, index_map):
            if single:  # grid-invariant block: no need for a second buffer
                return pl.BlockSpec(shape, index_map,
                                    pipeline_mode=pl.Buffered(1))
            return pl.BlockSpec(shape, index_map)

        args, in_specs = [], []
        for p, w, fat in zip(planes, weights, fats):
            wb = w.astype(jnp.bfloat16)
            if fat:
                wb = wb.reshape(k, k * w.shape[2], Cout)
            args += [p, wb]
            # TODO(synk): for production-size planes that exceed the VMEM budget,
            # replace this full-plane residency with windowed (th+k-1)-row halo
            # blocks (or a manual row-window DMA); needed mainly on v7x (64 MiB).
            in_specs.append(spec((1, Hp, Wp, p.shape[-1]),
                                 lambda n, h: (n, 0, 0, 0)))
            in_specs.append(spec(wb.shape,
                                 lambda n, h, nd=wb.ndim: (0,) * nd))
        args.append(bias2d)
        in_specs.append(pl.BlockSpec((1, Cout), lambda n, h: (0, 0)))

        kern = functools.partial(_conv_kernel, k=k, th=th, wp=Wp,
                                 n_in=len(planes), act=act, off=off,
                                 fat=fats, load_rows=load_rows)
        return pl.pallas_call(
            kern,
            out_shape=jax.ShapeDtypeStruct((N, Ho, Wp, Cout), out_dtype),
            grid=(N, Ho // th),
            in_specs=in_specs,
            out_specs=pl.BlockSpec((1, th, Wp, Cout), lambda n, h: (n, h, 0, 0)),
            compiler_params=pltpu.CompilerParams(
                dimension_semantics=("parallel", "parallel"),
                vmem_limit_bytes=_VMEM_BUDGET),
        )(*args)

    singles = [True, False] if _SINGLE_BUFFER_OK[0] else [False]
    fattens = [True, False] if (can_fat and _FATTEN_OK[0]) else [False]
    err = None
    for single in singles:
        for fat_en in fattens:
            try:
                y = run(single, fat_en)
            except Exception as e:           # fall back to a safer variant
                err = e
                continue
            _SINGLE_BUFFER_OK[0] = _SINGLE_BUFFER_OK[0] and single
            if can_fat:
                _FATTEN_OK[0] = _FATTEN_OK[0] and fat_en
            return y, Wo
    raise err


def conv2d_fused(inputs, bias, *, k, padding, act, out_dtype=jnp.bfloat16):
    """inputs: list of (x NHWC, w (k,k,Cin_i,Cout)); conv results are summed
    (fuses channel-concat + conv).  Fused bias + activation, bf16 MXU matmuls,
    f32 accumulation; full-width kernel stores are cropped here."""
    planes, infos, weights = [], [], []
    for x, w in inputs:
        xp, info = _pad_plane(x, padding)
        planes.append(xp)
        infos.append(info)
        weights.append(w)
    y, wo = _conv_call(planes, infos, weights, bias, k=k, conv_pad=padding,
                       act=act, out_dtype=out_dtype)
    return y if y.shape[2] == wo else y[:, :, :wo, :]


# ---------------------------------------------------------------------------
# Parameter initialization (deterministic, synthetic).  BN is folded: the scale
# is multiplied into the conv weights, the shift into the bias.
# ---------------------------------------------------------------------------
def _conv_w(key, k, cin, cout, std=0.05):
    return std * jax.random.normal(key, (k, k, cin, cout), jnp.float32)


def _bn_fold(key, c, eps=1e-5):
    kg, kb, km, kv = jax.random.split(key, 4)
    gamma = 1.0 + 0.1 * jax.random.normal(kg, (c,), jnp.float32)
    beta = 0.1 * jax.random.normal(kb, (c,), jnp.float32)
    mean = 0.1 * jax.random.normal(km, (c,), jnp.float32)
    var = jnp.abs(1.0 + 0.1 * jax.random.normal(kv, (c,), jnp.float32))
    scale = gamma / jnp.sqrt(var + eps)
    shift = beta - mean * scale
    return scale, shift


def init_combination(key, c_low, c_up):
    """CombinationModule(c_low, c_up, batch_norm=True):
       up  = Conv3x3(c_low->c_up) + BN + ReLU   (on the upsampled x_low)
       cat = Conv1x1(2*c_up->c_up) + BN + ReLU  (concat fused into two matmuls)."""
    ks = jax.random.split(key, 6)
    up_w = _conv_w(ks[0], 3, c_low, c_up)
    up_b = 0.05 * jax.random.normal(ks[1], (c_up,), jnp.float32)
    s1, sh1 = _bn_fold(ks[2], c_up)
    cat_w = _conv_w(ks[3], 1, 2 * c_up, c_up)
    cat_b = 0.05 * jax.random.normal(ks[4], (c_up,), jnp.float32)
    s2, sh2 = _bn_fold(ks[5], c_up)
    return dict(
        up_w=(up_w * s1).astype(jnp.bfloat16),
        up_bias=(s1 * up_b + sh1).astype(jnp.float32),
        cat_w_low=(cat_w[:, :, :c_up, :] * s2).astype(jnp.bfloat16),
        cat_w_up=(cat_w[:, :, c_up:, :] * s2).astype(jnp.bfloat16),
        cat_bias=(s2 * cat_b + sh2).astype(jnp.float32),
    )


def init_head(key, cin, head_conv, classes, k2, is_cls):
    ks = jax.random.split(key, 2)
    w1 = _conv_w(ks[0], 3, cin, head_conv)
    b1 = jnp.zeros((head_conv,), jnp.float32)
    w2 = _conv_w(ks[1], k2, head_conv, classes)
    b2 = (jnp.full((classes,), -2.19, jnp.float32) if is_cls
          else jnp.zeros((classes,), jnp.float32))
    return dict(w1=w1.astype(jnp.bfloat16), b1=b1,
                w2=w2.astype(jnp.bfloat16), b2=b2)


def init_params(key, heads, head_conv, final_kernel):
    ks = jax.random.split(key, 8 + len(heads))
    # resnet_type='34' config: backbone pyramid c2(64,/4) c3(128,/8) c4(256,/16) c5(512,/32)
    backbone = []
    for i, (_, cout) in enumerate(((4, 64), (8, 128), (16, 256), (32, 512))):
        kw, kb = jax.random.split(ks[i], 2)
        backbone.append(dict(w=_conv_w(kw, 1, 3, cout).astype(jnp.bfloat16),
                             b=0.05 * jax.random.normal(kb, (cout,), jnp.float32)))
    params = dict(
        backbone=backbone,
        dec_c4=init_combination(ks[4], 512, 256),
        dec_c3=init_combination(ks[5], 256, 128),
        dec_c2=init_combination(ks[6], 128, 64),
    )
    hp = {}
    for i, (name, classes) in enumerate(heads.items()):
        k2 = 3 if name in ("obboxes_params", "hbboxes_params") else final_kernel
        hp[name] = init_head(ks[8 + i], 64, head_conv, classes, k2,
                             name[:4] == "cls_")
    params["heads"] = hp
    return params


# ---------------------------------------------------------------------------
# Forward pass
# ---------------------------------------------------------------------------
def combination_module(x_low, x_up, p):
    n, hu, wu = x_up.shape[0], x_up.shape[1], x_up.shape[2]
    cl = x_low.shape[-1]
    # TODO(synk): fuse this fixed 2x bilinear upsample into the 'up' 3x3 conv
    # kernel (the source plane is already resident in VMEM); kept as bf16 glue.
    x_low_up = jax.image.resize(x_low, (n, hu, wu, cl),
                                "bilinear").astype(jnp.bfloat16)
    u = conv2d_fused([(x_low_up, p["up_w"])], p["up_bias"],
                     k=3, padding=1, act="relu")
    # channel-concat fused into the 1x1 conv: relu([u, x_up] @ W + b)
    return conv2d_fused([(u, p["cat_w_low"]), (x_up, p["cat_w_up"])],
                        p["cat_bias"], k=1, padding=0, act="relu")


def ctrbox_forward(x_nchw, params, heads, final_kernel, head_conv):
    if "masks" in heads:
        # TODO(synk): 'masks' head (dec_seg1 / dec_seq2 path) not implemented.
        raise NotImplementedError("'masks' head is not supported")

    x = jnp.transpose(x_nchw, (0, 2, 3, 1)).astype(jnp.bfloat16)  # NCHW -> NHWC
    # TODO(synk): the ResNet-34 base_network is an external module not included
    # in the reference; replaced by a deterministic stride-pool + 1x1 Pallas conv
    # producing the same channel/stride pyramid (pooling kept in bf16).
    n, h, w, c = x.shape
    feats = []
    for (stride, _), bp in zip(((4, 64), (8, 128), (16, 256), (32, 512)),
                               params["backbone"]):
        pooled = (x.reshape(n, h // stride, stride, w // stride, stride, c)
                   .mean((2, 4)).astype(jnp.bfloat16))
        feats.append(conv2d_fused([(pooled, bp["w"])], bp["b"],
                                  k=1, padding=0, act="relu"))
    c2, c3, c4, c5 = feats                      # x[-4], x[-3], x[-2], x[-1]

    c4_combine = combination_module(c5, c4, params["dec_c4"])
    c3_combine = combination_module(c4_combine, c3, params["dec_c3"])
    c2_combine = combination_module(c3_combine, c2, params["dec_c2"])

    # Fuse all heads' first 3x3 convs into one lane-dense conv.
    names = list(heads.keys())
    w1_all = jnp.concatenate([params["heads"][m]["w1"] for m in names], axis=-1)
    b1_all = jnp.concatenate([params["heads"][m]["b1"] for m in names], axis=0)
    h_all = conv2d_fused([(c2_combine, w1_all)], b1_all,
                         k=3, padding=1, act="relu")

    # Second head convs: group heads sharing (kernel, padding, activation) into a
    # single Pallas call over the FULL (unsliced) h_all using a block-diagonal
    # weight -> no per-head HBM channel slices / re-pads; one shared padded plane.
    def head_cfg(name):
        if name in ("obboxes_params", "hbboxes_params"):
            k2, pad2 = 3, 1
        else:
            k2, pad2 = final_kernel, final_kernel // 2
        act2 = "sigmoid" if (name[:4] == "cls_" or name == "obboxes_theta") else "none"
        return k2, pad2, act2

    groups = {}
    for idx, name in enumerate(names):
        groups.setdefault(head_cfg(name), []).append((idx, name, heads[name]))

    total_cin = len(names) * head_conv
    max_pad = max(cfg[1] for cfg in groups)
    h_pad, h_info = _pad_plane(h_all, max_pad)

    dec_dict = {}
    for (k2, pad2, act2), members in groups.items():
        cout_total = sum(m[2] for m in members)
        cout_pad = max(128, _round_up(cout_total, 128))     # lane-dense output
        wg = jnp.zeros((k2, k2, total_cin, cout_pad), jnp.bfloat16)
        bg = jnp.zeros((cout_pad,), jnp.float32)
        col = 0
        for idx, name, classes in members:
            hp = params["heads"][name]
            wg = wg.at[:, :, idx * head_conv:(idx + 1) * head_conv,
                       col:col + classes].set(hp["w2"].astype(jnp.bfloat16))
            bg = bg.at[col:col + classes].set(hp["b2"])
            col += classes
        y, wo = _conv_call([h_pad], [h_info], [wg], bg, k=k2, conv_pad=pad2,
                           act=act2, out_dtype=jnp.float32)
        y = y[:, :, :wo, :]                                  # mandatory crop
        col = 0
        for idx, name, classes in members:
            o = y[..., col:col + classes]                    # drop lane padding
            col += classes
            dec_dict[name] = jnp.transpose(o, (0, 3, 1, 2))  # back to NCHW
    return dec_dict


# ---------------------------------------------------------------------------
if __name__ == "__main__":
    key = jax.random.PRNGKey(0)
    heads = {"cls_coarse": 3, "obboxes_params": 10, "obboxes_theta": 1}
    down_ratio, final_kernel, head_conv = 4, 1, 64   # channels[log2(4)] = 64

    params = init_params(key, heads, head_conv, final_kernel)
    x = jax.random.normal(jax.random.fold_in(key, 123), (2, 3, 64, 64), jnp.float32)

    out = ctrbox_forward(x, params, heads, final_kernel, head_conv)
    out = jax.block_until_ready(out)

    expected_hw = (64 // down_ratio, 64 // down_ratio)
    for name, classes in heads.items():
        assert out[name].shape == (2, classes) + expected_hw, (name, out[name].shape)
        if name[:4] == "cls_" or name == "obboxes_theta":
            v = out[name]
            assert float(jnp.min(v)) >= 0.0 and float(jnp.max(v)) <= 1.0
    print("KERNEL_OK")
</pallas_src>

<mosaic_0001>
module attributes {stable_mosaic.version = 11 : i64} {
  func.func @_conv_kernel(%arg0: i32, %arg1: i32, %arg2: memref<1x17x16x3xbf16, #tpu.memory_space<vmem>>, %arg3: memref<1x1x3x64xbf16, #tpu.memory_space<vmem>>, %arg4: memref<1x64xf32, #tpu.memory_space<vmem>>, %arg5: memref<1x16x16x64xbf16, #tpu.memory_space<vmem>>) attributes {dimension_semantics = [#tpu.dimension_semantics<parallel>, #tpu.dimension_semantics<parallel>], iteration_bounds = array<i64: 2, 1>, scalar_prefetch = 0 : i64, scratch_operands = 0 : i64, tpu.core_type = #tpu.core_type<tc>, window_params = [{pipeline_mode = #tpu.pipeline_mode<synchronous>, transform_indices = @transform_0, window_bounds = array<i64: 1, 17, 16, 3>}, {pipeline_mode = #tpu.pipeline_mode<synchronous>, transform_indices = @transform_1, window_bounds = array<i64: 1, 1, 3, 64>}, {pipeline_mode = #tpu.pipeline_mode<synchronous>, transform_indices = @transform_2, window_bounds = array<i64: 1, 64>}, {transform_indices = @transform_3, window_bounds = array<i64: 1, 16, 16, 64>}]} {
    %c16_i32 = arith.constant 16 : i32
    %0 = arith.muli %arg1, %c16_i32 : i32
    %c0_i32 = arith.constant 0 : i32
    %1 = arith.addi %0, %c0_i32 : i32
    %c0 = arith.constant 0 : index
    %2 = arith.index_cast %1 : i32 to index
    %c0_0 = arith.constant 0 : index
    %c0_1 = arith.constant 0 : index
    %3 = vector.load %arg2[%c0, %2, %c0_0, %c0_1] : memref<1x17x16x3xbf16, #tpu.memory_space<vmem>>, vector<1x16x16x3xbf16>
    %4 = vector.shape_cast %3 : vector<1x16x16x3xbf16> to vector<16x16x3xbf16>
    %5 = vector.shape_cast %4 : vector<16x16x3xbf16> to vector<256x3xbf16>
    %6 = vector.extract_strided_slice %5 {offsets = [0, 0], sizes = [256, 3], strides = [1, 1]} : vector<256x3xbf16> to vector<256x3xbf16>
    %c0_2 = arith.constant 0 : index
    %c0_3 = arith.constant 0 : index
    %c0_4 = arith.constant 0 : index
    %c0_5 = arith.constant 0 : index
    %7 = vector.load %arg3[%c0_2, %c0_3, %c0_4, %c0_5] : memref<1x1x3x64xbf16, #tpu.memory_space<vmem>>, vector<1x1x3x64xbf16>
    %8 = vector.shape_cast %7 : vector<1x1x3x64xbf16> to vector<3x64xbf16>
    %cst = arith.constant dense<0.000000e+00> : vector<256x64xf32>
    %9 = tpu.matmul %6, %8, %cst {dimension_numbers = #tpu.dot_dimension_numbers<[1], [0], [0], [1], [0, 0, 1, 1], [], []>} : vector<256x3xbf16>, vector<3x64xbf16>, vector<256x64xf32> -> vector<256x64xf32>
    %c0_6 = arith.constant 0 : index
    %c0_7 = arith.constant 0 : index
    %10 = vector.load %arg4[%c0_6, %c0_7] : memref<1x64xf32, #tpu.memory_space<vmem>>, vector<1x64xf32>
    %11 = vector.broadcast %10 : vector<1x64xf32> to vector<256x64xf32>
    %12 = arith.addf %9, %11 : vector<256x64xf32>
    %cst_8 = arith.constant 0.000000e+00 : f32
    %13 = vector.broadcast %cst_8 : f32 to vector<256x64xf32>
    %14 = arith.maximumf %12, %13 : vector<256x64xf32>
    %15 = vector.shape_cast %14 : vector<256x64xf32> to vector<16x16x64xf32>
    %16 = arith.truncf %15 : vector<16x16x64xf32> to vector<16x16x64xbf16>
    %c0_9 = arith.constant 0 : index
    %c0_10 = arith.constant 0 : index
    %c0_11 = arith.constant 0 : index
    %c0_12 = arith.constant 0 : index
    %17 = vector.load %arg5[%c0_9, %c0_10, %c0_11, %c0_12] : memref<1x16x16x64xbf16, #tpu.memory_space<vmem>>, vector<1x16x16x64xbf16>
    %18 = vector.shape_cast %17 : vector<1x16x16x64xbf16> to vector<16x16x64xbf16>
    %19 = vector.shape_cast %16 : vector<16x16x64xbf16> to vector<1x16x16x64xbf16>
    tpu.vector_store %arg5[%c0_9, %c0_10, %c0_11, %c0_12], %19 {strides = array<i32>} : memref<1x16x16x64xbf16, #tpu.memory_space<vmem>>, vector<1x16x16x64xbf16>,
    return
  }
  func.func @transform_0(%arg0: i32, %arg1: i32) -> (i32, i32, i32, i32) {
    %c0_i32 = arith.constant 0 : i32
    %c0_i32_0 = arith.constant 0 : i32
    %c0_i32_1 = arith.constant 0 : i32
    %c0_i32_2 = arith.constant 0 : i32
    return %arg0, %c0_i32, %c0_i32_0, %c0_i32_1 : i32, i32, i32, i32
  }
  func.func @transform_1(%arg0: i32, %arg1: i32) -> (i32, i32, i32, i32) {
    %c0_i32 = arith.constant 0 : i32
    %c0_i32_0 = arith.constant 0 : i32
    %c0_i32_1 = arith.constant 0 : i32
    %c0_i32_2 = arith.constant 0 : i32
    %c0_i32_3 = arith.constant 0 : i32
    return %c0_i32, %c0_i32_0, %c0_i32_1, %c0_i32_2 : i32, i32, i32, i32
  }
  func.func @transform_2(%arg0: i32, %arg1: i32) -> (i32, i32) {
    %c0_i32 = arith.constant 0 : i32
    %c0_i32_0 = arith.constant 0 : i32
    %c0_i32_1 = arith.constant 0 : i32
    return %c0_i32, %c0_i32_0 : i32, i32
  }
  func.func @transform_3(%arg0: i32, %arg1: i32) -> (i32, i32, i32, i32) {
    %c0_i32 = arith.constant 0 : i32
    %c0_i32_0 = arith.constant 0 : i32
    %c0_i32_1 = arith.constant 0 : i32
    return %arg0, %arg1, %c0_i32, %c0_i32_0 : i32, i32, i32, i32
  }
}

module attributes {stable_mosaic.version = 11 : i64} {
  func.func @_conv_kernel(%arg0: i32, %arg1: i32, %arg2: memref<1x17x16x3xbf16, #tpu.memory_space<vmem>>, %arg3: memref<1x1x3x64xbf16, #tpu.memory_space<vmem>>, %arg4: memref<1x64xf32, #tpu.memory_space<vmem>>, %arg5: memref<1x16x16x64xbf16, #tpu.memory_space<vmem>>) attributes {dimension_semantics = [#tpu.dimension_semantics<parallel>, #tpu.dimension_semantics<parallel>], iteration_bounds = array<i64: 2, 1>, scalar_prefetch = 0 : i64, scratch_operands = 0 : i64, tpu.core_type = #tpu.core_type<tc>, window_params = [{transform_indices = @transform_0, window_bounds = array<i64: 1, 17, 16, 3>}, {pipeline_mode = #tpu.pipeline_mode<synchronous>, transform_indices = @transform_1, window_bounds = array<i64: 1, 1, 3, 64>}, {pipeline_mode = #tpu.pipeline_mode<synchronous>, transform_indices = @transform_2, window_bounds = array<i64: 1, 64>}, {transform_indices = @transform_3, window_bounds = array<i64: 1, 16, 16, 64>}]} {
    %c16_i32 = arith.constant 16 : i32
    %0 = arith.muli %arg1, %c16_i32 : i32
    %c0_i32 = arith.constant 0 : i32
    %1 = arith.addi %0, %c0_i32 : i32
    %c0 = arith.constant 0 : index
    %2 = arith.index_cast %1 : i32 to index
    %c0_0 = arith.constant 0 : index
    %c0_1 = arith.constant 0 : index
    %3 = vector.load %arg2[%c0, %2, %c0_0, %c0_1] : memref<1x17x16x3xbf16, #tpu.memory_space<vmem>>, vector<1x16x16x3xbf16>
    %4 = vector.shape_cast %3 : vector<1x16x16x3xbf16> to vector<16x16x3xbf16>
    %5 = vector.shape_cast %4 : vector<16x16x3xbf16> to vector<256x3xbf16>
    %6 = vector.extract_strided_slice %5 {offsets = [0, 0], sizes = [256, 3], strides = [1, 1]} : vector<256x3xbf16> to vector<256x3xbf16>
    %c0_2 = arith.constant 0 : index
    %c0_3 = arith.constant 0 : index
    %c0_4 = arith.constant 0 : index
    %c0_5 = arith.constant 0 : index
    %7 = vector.load %arg3[%c0_2, %c0_3, %c0_4, %c0_5] : memref<1x1x3x64xbf16, #tpu.memory_space<vmem>>, vector<1x1x3x64xbf16>
    %8 = vector.shape_cast %7 : vector<1x1x3x64xbf16> to vector<3x64xbf16>
    %cst = arith.constant dense<0.000000e+00> : vector<256x64xf32>
    %9 = tpu.matmul %6, %8, %cst {dimension_numbers = #tpu.dot_dimension_numbers<[1], [0], [0], [1], [0, 0, 1, 1], [], []>} : vector<256x3xbf16>, vector<3x64xbf16>, vector<256x64xf32> -> vector<256x64xf32>
    %c0_6 = arith.constant 0 : index
    %c0_7 = arith.constant 0 : index
    %10 = vector.load %arg4[%c0_6, %c0_7] : memref<1x64xf32, #tpu.memory_space<vmem>>, vector<1x64xf32>
    %11 = vector.broadcast %10 : vector<1x64xf32> to vector<256x64xf32>
    %12 = arith.addf %9, %11 : vector<256x64xf32>
    %cst_8 = arith.constant 0.000000e+00 : f32
    %13 = vector.broadcast %cst_8 : f32 to vector<256x64xf32>
    %14 = arith.maximumf %12, %13 : vector<256x64xf32>
    %15 = vector.shape_cast %14 : vector<256x64xf32> to vector<16x16x64xf32>
    %16 = arith.truncf %15 : vector<16x16x64xf32> to vector<16x16x64xbf16>
    %c0_9 = arith.constant 0 : index
    %c0_10 = arith.constant 0 : index
    %c0_11 = arith.constant 0 : index
    %c0_12 = arith.constant 0 : index
    %17 = vector.load %arg5[%c0_9, %c0_10, %c0_11, %c0_12] : memref<1x16x16x64xbf16, #tpu.memory_space<vmem>>, vector<1x16x16x64xbf16>
    %18 = vector.shape_cast %17 : vector<1x16x16x64xbf16> to vector<16x16x64xbf16>
    %19 = vector.shape_cast %16 : vector<16x16x64xbf16> to vector<1x16x16x64xbf16>
    tpu.vector_store %arg5[%c0_9, %c0_10, %c0_11, %c0_12], %19 {strides = array<i32>} : memref<1x16x16x64xbf16, #tpu.memory_space<vmem>>, vector<1x16x16x64xbf16>,
    return
  }
  func.func @transform_0(%arg0: i32, %arg1: i32) -> (i32, i32, i32, i32) {
    %c0_i32 = arith.constant 0 : i32
    %c0_i32_0 = arith.constant 0 : i32
    %c0_i32_1 = arith.constant 0 : i32
    %c0_i32_2 = arith.constant 0 : i32
    return %arg0, %c0_i32, %c0_i32_0, %c0_i32_1 : i32, i32, i32, i32
  }
  func.func @transform_1(%arg0: i32, %arg1: i32) -> (i32, i32, i32, i32) {
    %c0_i32 = arith.constant 0 : i32
    %c0_i32_0 = arith.constant 0 : i32
    %c0_i32_1 = arith.constant 0 : i32
    %c0_i32_2 = arith.constant 0 : i32
    %c0_i32_3 = arith.constant 0 : i32
    return %c0_i32, %c0_i32_0, %c0_i32_1, %c0_i32_2 : i32, i32, i32, i32
  }
  func.func @transform_2(%arg0: i32, %arg1: i32) -> (i32, i32) {
    %c0_i32 = arith.constant 0 : i32
    %c0_i32_0 = arith.constant 0 : i32
    %c0_i32_1 = arith.constant 0 : i32
    return %c0_i32, %c0_i32_0 : i32, i32
  }
  func.func @transform_3(%arg0: i32, %arg1: i32) -> (i32, i32, i32, i32) {
    %c0_i32 = arith.constant 0 : i32
    %c0_i32_0 = arith.constant 0 : i32
    %c0_i32_1 = arith.constant 0 : i32
    return %arg0, %arg1, %c0_i32, %c0_i32_0 : i32, i32, i32, i32
  }
}

</mosaic_0001>

<llo_original>
// kernel: tpu_custom_call.1
$region0: #{tpu_custom_call.1}
  #allocation0 [shape = 'u32[]', space=smem, size = 0x4, offset = 0x4, fixed_abs, tag = 'smem constant byte address 0x4 - core index']
  #allocation1 [shape = 'u32[144,128]{1,0:T(1,128)}', space=vmem, size = 0x12000, scoped, tag = 'internal scratch']
  %s0 = inlined_call_operand.vmem [shape: bf16[2,17,16,3], index: 0, kind: input, shape index: {}]
  %s1 = inlined_call_operand.vmem [shape: bf16[1,1,3,64], index: 1, kind: input, shape index: {}]
  %s2 = inlined_call_operand.vmem [shape: f32[1,64], index: 2, kind: input, shape index: {}]
  %s3 = inlined_call_operand.hbm [shape: bf16[2,16,16,64], index: 3, kind: output, shape index: {}]
  %s4 = sld [smem:[#allocation0]]
  $region45: #{tpu_custom_call.1} parent=0
    _
  %s6 = ssub.s32 1, %s4
  %s7 = scalar_select 0, %s6, %s4
  $region1: #{tpu_custom_call.1} parent=0
    #allocation2 [shape = 'u8[131072]{0}', space=vmem, size = 0x20000, scoped, tag = 'output window, operand 0']
    #allocation3 [shape = 's32[2]{0}', space=sflag, size = 0x8, scoped, tag = 'scoped memory for tpu_custom_call.1']
    %8 = vsyncpa [#allocation3], 0
    %s9 = scalar_lea.sflag [#allocation3], 1
    %10 = vsyncpa %s9, 0
    loop: start=0, step=1, limit=4
    $region2: #{tpu_custom_call.1} parent=1 // loop_pre_header
      _
    $region3: #{tpu_custom_call.1} parent=1 // loop_header
      %s12 = sphi 0, %s16
      %p13 = scmp.ge.s32.totalorder %s12, 4
      %s19 = sphi 0, %s31
      %s20 = sphi 0, %s27
      %s21 = sphi 0, %s19
      %s22 = sphi 0, %s20
      %s23 = sphi 0, %s21
      %s24 = sphi 0, %s22
      %s34 = sphi 0, %s36
      %s37 = sphi 0, %s34
      %s38 = sphi 0, %s37
      %s54 = sphi 0, %s38
      %s58 = sphi 0, %s58
      %s60 = sphi 0, %s58
      %s61 = sphi 0, %s60
      %s75 = sphi 0, %s61
      %s79 = sphi 0, %s79
      %s81 = sphi 0, %s79
      %s82 = sphi 0, %s81
      %s96 = sphi 0, %s82
      %s104 = sphi 0, %s106
      %s107 = sphi 0, %s104
      %s108 = sphi 0, %s107
      %s124 = sphi 0, %s108
    $region4: #{tpu_custom_call.1} parent=1 // loop_header_branch
      %15 = sbr.rel (%p13) target = $region8
    $region5: #{tpu_custom_call.1} parent=1 // loop_body
      %s17 = ssub.s32 %s12, 1
      %s18 = ssub.s32 %s12, 2
      %s25 = sadd.s32 1, %s20
      %p26 = scmp.ge.s32.totalorder %s25, 1
      %s27 = scalar_select %p26, 0, %s25
      %s28 = sadd.s32 1, %s19
      %s29 = scalar_select %p26, %s28, %s19
      %p30 = scmp.ge.s32.totalorder %s29, 2
      %s31 = scalar_select %p30, 0, %s29
      %s32 = ssub.s32 %s19, %s31
      %p33 = scmp.eq.s32.totalorder %s32, 0
      %s35 = sadd.s32 %s34, 1
      %s36 = scalar_select %p33, %s34, %s35
      %p39 = pneg %p33
      %p40 = scmp.eq.s32.totalorder %s12, 1
      %p41 = por %p39, %p40
      %p42 = scmp.ne.s32.totalorder %s34, %s37
      %p43 = scmp.eq.s32.totalorder %s12, 0
      %p44 = por %p42, %p43
      %p45 = scmp.ne.s32.totalorder %s34, %s37
      %p46 = scmp.eq.s32.totalorder %s17, 1
      %p47 = por %p45, %p46
      %p48 = scmp.ne.s32.totalorder %s37, %s38
      %p49 = scmp.eq.s32.totalorder %s17, 0
      %p50 = por %p48, %p49
      %p51 = scmp.ne.s32.totalorder %s37, %s38
      %p52 = scmp.eq.s32.totalorder %s18, 1
      %p53 = por %p51, %p52
      %p55 = scmp.ne.s32.totalorder %s38, %s54
      %p56 = scmp.eq.s32.totalorder %s18, 0
      %p57 = por %p55, %p56
      %s59 = sadd.s32 %s58, 1
      %p62 = scmp.eq.s32.totalorder %s12, 1
      %p63 = scmp.ne.s32.totalorder %s58, %s60
      %p64 = scmp.eq.s32.totalorder %s12, 0
      %p65 = por %p63, %p64
      %p66 = scmp.ne.s32.totalorder %s58, %s60
      %p67 = scmp.eq.s32.totalorder %s17, 1
      %p68 = por %p66, %p67
      %p69 = scmp.ne.s32.totalorder %s60, %s61
      %p70 = scmp.eq.s32.totalorder %s17, 0
      %p71 = por %p69, %p70
      %p72 = scmp.ne.s32.totalorder %s60, %s61
      %p73 = scmp.eq.s32.totalorder %s18, 1
      %p74 = por %p72, %p73
      %p76 = scmp.ne.s32.totalorder %s61, %s75
      %p77 = scmp.eq.s32.totalorder %s18, 0
      %p78 = por %p76, %p77
      %s80 = sadd.s32 %s79, 1
      %p83 = scmp.eq.s32.totalorder %s12, 1
      %p84 = scmp.ne.s32.totalorder %s79, %s81
      %p85 = scmp.eq.s32.totalorder %s12, 0
      %p86 = por %p84, %p85
      %p87 = scmp.ne.s32.totalorder %s79, %s81
      %p88 = scmp.eq.s32.totalorder %s17, 1
      %p89 = por %p87, %p88
      %p90 = scmp.ne.s32.totalorder %s81, %s82
      %p91 = scmp.eq.s32.totalorder %s17, 0
      %p92 = por %p90, %p91
      %p93 = scmp.ne.s32.totalorder %s81, %s82
      %p94 = scmp.eq.s32.totalorder %s18, 1
      %p95 = por %p93, %p94
      %p97 = scmp.ne.s32.totalorder %s82, %s96
      %p98 = scmp.eq.s32.totalorder %s18, 0
      %p99 = por %p97, %p98
      %s100 = ssub.s32 %s19, %s31
      %s101 = ssub.s32 %s20, %s27
      %s102 = sor.u32 %s100, %s101
      %p103 = scmp.eq.s32.totalorder %s102, 0
      %s105 = sadd.s32 %s104, 1
      %s106 = scalar_select %p103, %s104, %s105
      %p109 = pneg %p103
      %p110 = scmp.eq.s32.totalorder %s12, 1
      %p111 = por %p109, %p110
      %p112 = scmp.ne.s32.totalorder %s104, %s107
      %p113 = scmp.eq.s32.totalorder %s12, 0
      %p114 = por %p112, %p113
      %p115 = scmp.ne.s32.totalorder %s104, %s107
      %p116 = scmp.eq.s32.totalorder %s17, 1
      %p117 = por %p115, %p116
      %p118 = scmp.ne.s32.totalorder %s107, %s108
      %p119 = scmp.eq.s32.totalorder %s17, 0
      %p120 = por %p118, %p119
      %p121 = scmp.ne.s32.totalorder %s107, %s108
      %p122 = scmp.eq.s32.totalorder %s18, 1
      %p123 = por %p121, %p122
      %p125 = scmp.ne.s32.totalorder %s108, %s124
      %p126 = scmp.eq.s32.totalorder %s18, 0
      %p127 = por %p125, %p126
      %p128 = scmp.le.s32.totalorder 1, %s12
      %p129 = scmp.lt.s32.totalorder %s12, 3
      %p130 = pnand %p128, %p129
      %p131 = pneg %p130
      // Predicated region
      $region9: #{tpu_custom_call.1} parent=5 // pred_check
        _
      $region10: #{tpu_custom_call.1} parent=5 // pred_check_branch
        %133 = sbr.rel (%p130) target = $region12
      $region11: #{tpu_custom_call.1} parent=5 // pred_region
        %s134 = ssub.s32 %s12, 1
        // Predicated region
        $region13: #{tpu_custom_call.1} parent=11 // pred_check
          %p135 = pneg %p50
        $region14: #{tpu_custom_call.1} parent=11 // pred_check_branch
          %137 = sbr.rel (%p135) target = $region16
        $region15: #{tpu_custom_call.1} parent=11 // pred_region
          %p138 = scmp.lt.s32.totalorder %s21, 1
          %s139 = scalar_select %p138, %s21, 1
          %s140 = smul.addr %s139, 34
          %s141 = smul.addr %s140, 4
          %s142 = scalar_lea.vmem %s0, %s141
        $region16: #{tpu_custom_call.1} parent=11 // pred_fallthru
          _
        // Predicated region
        $region17: #{tpu_custom_call.1} parent=11 // pred_check
          %p143 = pneg %p71
        $region18: #{tpu_custom_call.1} parent=11 // pred_check_branch
          %145 = sbr.rel (%p143) target = $region20
        $region19: #{tpu_custom_call.1} parent=11 // pred_region
          _
        $region20: #{tpu_custom_call.1} parent=11 // pred_fallthru
          _
        // Predicated region
        $region21: #{tpu_custom_call.1} parent=11 // pred_check
          %p146 = pneg %p92
        $region22: #{tpu_custom_call.1} parent=11 // pred_check_branch
          %148 = sbr.rel (%p146) target = $region24
        $region23: #{tpu_custom_call.1} parent=11 // pred_region
          _
        $region24: #{tpu_custom_call.1} parent=11 // pred_fallthru
          _
      $region12: #{tpu_custom_call.1} parent=5 // pred_fallthru
        _
      %p149 = scmp.lt.s32.totalorder %s12, 2
      // Predicated region
      $region25: #{tpu_custom_call.1} parent=5 // pred_check
        %p150 = pneg %p149
      $region26: #{tpu_custom_call.1} parent=5 // pred_check_branch
        %152 = sbr.rel (%p150) target = $region28
      $region27: #{tpu_custom_call.1} parent=5 // pred_region
        _
      $region28: #{tpu_custom_call.1} parent=5 // pred_fallthru
        _
      %p153 = scmp.le.s32.totalorder 1, %s12
      %p154 = scmp.lt.s32.totalorder %s12, 3
      %p155 = pnand %p153, %p154
      %p156 = pneg %p155
      // Predicated region
      $region29: #{tpu_custom_call.1} parent=5 // pred_check
        _
      $region30: #{tpu_custom_call.1} parent=5 // pred_check_branch
        %158 = sbr.rel (%p155) target = $region32
      $region31: #{tpu_custom_call.1} parent=5 // pred_region
        %s159 = ssub.s32 %s12, 1
        %p160 = scmp.lt.s32.totalorder %s21, 1
        %s161 = scalar_select %p160, %s21, 1
        %s162 = smul.addr %s161, 34
        %s163 = smul.addr %s162, 4
        %s164 = scalar_lea.vmem %s0, %s163
        %p165 = pneg %p50
        %p166 = pneg %p47
        %p167 = pneg %p71
        %p168 = pneg %p68
        %p169 = pneg %p92
        %p170 = pneg %p89
        %p171 = pneg %p120
        %p172 = pneg %p117
        %s173 = sand.u32 %s107, 1
        %s174 = scalar_lea.sflag [#allocation3], %s173
        %s175 = sand.u32 %s107, 1
        %s176 = smul.addr %s175, 128
        %s177 = scalar_lea.vmem [#allocation2], %s176
        %p178 = scmp.lt.s32.totalorder %s21, 1
        %s179 = scalar_select %p178, %s21, 1
        %s180 = smul.addr %s179, 34
        %s181 = smul.addr %s180, 4
        %s182 = scalar_lea.vmem %s0, %s181
        %s183 = smul.u32 16, %s22
        %s185 = smul.u32 %s22, 16
        %s186 = smul.u32 %s185, 2
        %s187 = smul.addr %s186, 4
        %s188 = scalar_lea.vmem %s182, %s187
        %v189 = vld [vmem:[%s188] sm:$0xf]
        %v190 = vld [vmem:[%s188 + $0x4] sm:$0xf]
        %v191 = vld [vmem:[%s188 + $0x8] sm:$0xf]
        %v192 = vld [vmem:[%s188 + $0xc] sm:$0xf]
        %v193 = vld [vmem:[%s188 + $0x10] sm:$0xf]
        %v194 = vld [vmem:[%s188 + $0x14] sm:$0xf]
        %v195 = vld [vmem:[%s188 + $0x18] sm:$0xf]
        %v196 = vld [vmem:[%s188 + $0x1c] sm:$0xf]
        %v197 = vld [vmem:[%s188 + $0x20] sm:$0xf]
        %v198 = vld [vmem:[%s188 + $0x24] sm:$0xf]
        %v199 = vld [vmem:[%s188 + $0x28] sm:$0xf]
        %v200 = vld [vmem:[%s188 + $0x2c] sm:$0xf]
        %v201 = vld [vmem:[%s188 + $0x30] sm:$0xf]
        %v202 = vld [vmem:[%s188 + $0x34] sm:$0xf]
        %v203 = vld [vmem:[%s188 + $0x38] sm:$0xf]
        %v204 = vld [vmem:[%s188 + $0x3c] sm:$0xf]
        %v205 = vld [vmem:[%s188 + $0x40] sm:$0xf]
        %v206 = vld [vmem:[%s188 + $0x44] sm:$0xf]
        %v207 = vld [vmem:[%s188 + $0x48] sm:$0xf]
        %v208 = vld [vmem:[%s188 + $0x4c] sm:$0xf]
        %v209 = vld [vmem:[%s188 + $0x50] sm:$0xf]
        %v210 = vld [vmem:[%s188 + $0x54] sm:$0xf]
        %v211 = vld [vmem:[%s188 + $0x58] sm:$0xf]
        %v212 = vld [vmem:[%s188 + $0x5c] sm:$0xf]
        %v213 = vld [vmem:[%s188 + $0x60] sm:$0xf]
        %v214 = vld [vmem:[%s188 + $0x64] sm:$0xf]
        %v215 = vld [vmem:[%s188 + $0x68] sm:$0xf]
        %v216 = vld [vmem:[%s188 + $0x6c] sm:$0xf]
        %v217 = vld [vmem:[%s188 + $0x70] sm:$0xf]
        %v218 = vld [vmem:[%s188 + $0x74] sm:$0xf]
        %v219 = vld [vmem:[%s188 + $0x78] sm:$0xf]
        %v220 = vld [vmem:[%s188 + $0x7c] sm:$0xf]
        %v221 = vld [vmem:[%s1] sm:$0x3]
        %v222 = vld [vmem:[%s2] sm:$0x1]
        %v224 = vlaneseq
        %v225 = vshrl.u32 %v224, 7
        %v226 = vsub.s32 0, %v225
        %v227 = vrot.slane %v222, %v226
        %v261 = vunpack.c.l.b16 %v189
        %v262 = vunpack.c.l.b16 %v190
        %v263 = vunpack.c.l.b16 %v191
        %v264 = vunpack.c.l.b16 %v192
        %v265 = vunpack.c.l.b16 %v193
        %v266 = vunpack.c.l.b16 %v194
        %v267 = vunpack.c.l.b16 %v195
        %v268 = vunpack.c.l.b16 %v196
        %v269 = vunpack.c.l.b16 %v197
        %v270 = vunpack.c.l.b16 %v198
        %v271 = vunpack.c.l.b16 %v199
        %v272 = vunpack.c.l.b16 %v200
        %v273 = vunpack.c.l.b16 %v201
        %v274 = vunpack.c.l.b16 %v202
        %v275 = vunpack.c.l.b16 %v203
        %v276 = vunpack.c.l.b16 %v204
        %v277 = vunpack.c.l.b16 %v205
        %v278 = vunpack.c.l.b16 %v206
        %v279 = vunpack.c.l.b16 %v207
        %v280 = vunpack.c.l.b16 %v208
        %v281 = vunpack.c.l.b16 %v209
        %v282 = vunpack.c.l.b16 %v210
        %v283 = vunpack.c.l.b16 %v211
        %v284 = vunpack.c.l.b16 %v212
        %v285 = vunpack.c.l.b16 %v213
        %v286 = vunpack.c.l.b16 %v214
        %v287 = vunpack.c.l.b16 %v215
        %v288 = vunpack.c.l.b16 %v216
        %v289 = vunpack.c.l.b16 %v217
        %v290 = vunpack.c.l.b16 %v218
        %v291 = vunpack.c.l.b16 %v219
        %v292 = vunpack.c.l.b16 %v220
        %v293 = vpack.c.b16 %v262, %v261
        %v294 = vpack.c.b16 %v264, %v263
        %v295 = vpack.c.b16 %v266, %v265
        %v296 = vpack.c.b16 %v268, %v267
        %v297 = vpack.c.b16 %v270, %v269
        %v298 = vpack.c.b16 %v272, %v271
        %v299 = vpack.c.b16 %v274, %v273
        %v300 = vpack.c.b16 %v276, %v275
        %v301 = vpack.c.b16 %v278, %v277
        %v302 = vpack.c.b16 %v280, %v279
        %v303 = vpack.c.b16 %v282, %v281
        %v304 = vpack.c.b16 %v284, %v283
        %v305 = vpack.c.b16 %v286, %v285
        %v306 = vpack.c.b16 %v288, %v287
        %v307 = vpack.c.b16 %v290, %v289
        %v308 = vpack.c.b16 %v292, %v291
        %vm309 = vcmask 23552
        %v311 = vsel %vm309, %v293, 0
        %v314 = vsel %vm309, %v294, 0
        %v317 = vsel %vm309, %v295, 0
        %v320 = vsel %vm309, %v296, 0
        %v323 = vsel %vm309, %v297, 0
        %v326 = vsel %vm309, %v298, 0
        %v329 = vsel %vm309, %v299, 0
        %v332 = vsel %vm309, %v300, 0
        %v335 = vsel %vm309, %v301, 0
        %v338 = vsel %vm309, %v302, 0
        %v341 = vsel %vm309, %v303, 0
        %v344 = vsel %vm309, %v304, 0
        %v347 = vsel %vm309, %v305, 0
        %v350 = vsel %vm309, %v306, 0
        %v353 = vsel %vm309, %v307, 0
        %v356 = vsel %vm309, %v308, 0
        %vm358 = vcmask 1040384
        %vm359 = vcmask 1041408
        %v360 = vsel %vm358, 4294967295, 65535
        %v361 = vsel %vm359, %v360, 0
        %v363 = vand.u32 %v221, %v361
        %365 = vmatprep.subr.bf16.mxu0 0
        %366 = vmatpush1.bf16.msra.mxu0 0
        %367 = vmatprep.subr.bf16.mxu0 0
        %368 = vmatpush1.bf16.msra.mxu0 0
        %369 = vmatprep.subr.bf16.mxu0 0
        %370 = vmatpush1.bf16.msra.mxu0 0
        %371 = vmatprep.subr.bf16.mxu0 0
        %372 = vmatpush1.bf16.msra.mxu0 0
        %373 = vmatprep.subr.bf16.mxu0 0
        %374 = vmatpush1.bf16.msra.mxu0 0
        %375 = vmatprep.subr.bf16.mxu0 0
        %376 = vmatpush1.bf16.msra.mxu0 0
        %377 = vmatprep.subr.bf16.mxu0 0
        %378 = vmatpush1.bf16.msra.mxu0 0
        %379 = vmatprep.subr.bf16.mxu0 0
        %380 = vmatpush1.bf16.msra.mxu0 %v363
        %381 = vmatprep.subr.bf16.mxu0 0
        %382 = vmatpush2.bf16.msra.mxu0 0
        %383 = vmatprep.subr.bf16.mxu0 0
        %384 = vmatpush2.bf16.msra.mxu0 0
        %385 = vmatprep.subr.bf16.mxu0 0
        %386 = vmatpush2.bf16.msra.mxu0 0
        %387 = vmatprep.subr.bf16.mxu0 0
        %388 = vmatpush2.bf16.msra.mxu0 0
        %389 = vmatprep.subr.bf16.mxu0 0
        %390 = vmatpush2.bf16.msra.mxu0 0
        %391 = vmatprep.subr.bf16.mxu0 0
        %392 = vmatpush2.bf16.msra.mxu0 0
        %393 = vmatprep.subr.bf16.mxu0 0
        %394 = vmatpush2.bf16.msra.mxu0 0
        %395 = vmatprep.subr.bf16.mxu0 0
        %396 = vmatpush2.bf16.msra.mxu0 0
        %397 = vmatprep.mubr.bf16.mxu0 0
        %398 = vmatmul.mubr.bf16.gmra.mxu0 %v311
        %v399 = vpop.f32.mrf.mxu0
        %v400 = vadd.f32 %v227, %v399
        %v401 = vpop.f32.mrf.mxu0
        %v402 = vpop.f32.mrf.mxu0
        %v403 = vadd.f32 %v227, %v402
        %v404 = vpop.f32.mrf.mxu0
        %405 = vmatprep.mubr.bf16.mxu0 0
        %406 = vmatmul.mubr.bf16.gmra.mxu0 %v314
        %v407 = vpop.f32.mrf.mxu0
        %v408 = vadd.f32 %v227, %v407
        %v409 = vpop.f32.mrf.mxu0
        %v410 = vpop.f32.mrf.mxu0
        %v411 = vadd.f32 %v227, %v410
        %v412 = vpop.f32.mrf.mxu0
        %413 = vmatprep.mubr.bf16.mxu0 0
        %414 = vmatmul.mubr.bf16.gmra.mxu0 %v317
        %v415 = vpop.f32.mrf.mxu0
        %v416 = vadd.f32 %v227, %v415
        %v417 = vpop.f32.mrf.mxu0
        %v418 = vpop.f32.mrf.mxu0
        %v419 = vadd.f32 %v227, %v418
        %v420 = vpop.f32.mrf.mxu0
        %421 = vmatprep.mubr.bf16.mxu0 0
        %422 = vmatmul.mubr.bf16.gmra.mxu0 %v320
        %v423 = vpop.f32.mrf.mxu0
        %v424 = vadd.f32 %v227, %v423
        %v425 = vpop.f32.mrf.mxu0
        %v426 = vpop.f32.mrf.mxu0
        %v427 = vadd.f32 %v227, %v426
        %v428 = vpop.f32.mrf.mxu0
        %429 = vmatprep.mubr.bf16.mxu0 0
        %430 = vmatmul.mubr.bf16.gmra.mxu0 %v323
        %v431 = vpop.f32.mrf.mxu0
        %v432 = vadd.f32 %v227, %v431
        %v433 = vpop.f32.mrf.mxu0
        %v434 = vpop.f32.mrf.mxu0
        %v435 = vadd.f32 %v227, %v434
        %v436 = vpop.f32.mrf.mxu0
        %437 = vmatprep.mubr.bf16.mxu0 0
        %438 = vmatmul.mubr.bf16.gmra.mxu0 %v326
        %v439 = vpop.f32.mrf.mxu0
        %v440 = vadd.f32 %v227, %v439
        %v441 = vpop.f32.mrf.mxu0
        %v442 = vpop.f32.mrf.mxu0
        %v443 = vadd.f32 %v227, %v442
        %v444 = vpop.f32.mrf.mxu0
        %445 = vmatprep.mubr.bf16.mxu0 0
        %446 = vmatmul.mubr.bf16.gmra.mxu0 %v329
        %v447 = vpop.f32.mrf.mxu0
        %v448 = vadd.f32 %v227, %v447
        %v449 = vpop.f32.mrf.mxu0
        %v450 = vpop.f32.mrf.mxu0
        %v451 = vadd.f32 %v227, %v450
        %v452 = vpop.f32.mrf.mxu0
        %453 = vmatprep.mubr.bf16.mxu0 0
        %454 = vmatmul.mubr.bf16.gmra.mxu0 %v332
        %v455 = vpop.f32.mrf.mxu0
        %v456 = vadd.f32 %v227, %v455
        %v457 = vpop.f32.mrf.mxu0
        %v458 = vpop.f32.mrf.mxu0
        %v459 = vadd.f32 %v227, %v458
        %v460 = vpop.f32.mrf.mxu0
        %461 = vmatprep.mubr.bf16.mxu0 0
        %462 = vmatmul.mubr.bf16.gmra.mxu0 %v335
        %v463 = vpop.f32.mrf.mxu0
        %v464 = vadd.f32 %v227, %v463
        %v465 = vpop.f32.mrf.mxu0
        %v466 = vpop.f32.mrf.mxu0
        %v467 = vadd.f32 %v227, %v466
        %v468 = vpop.f32.mrf.mxu0
        %469 = vmatprep.mubr.bf16.mxu0 0
        %470 = vmatmul.mubr.bf16.gmra.mxu0 %v338
        %v471 = vpop.f32.mrf.mxu0
        %v472 = vadd.f32 %v227, %v471
        %v473 = vpop.f32.mrf.mxu0
        %v474 = vpop.f32.mrf.mxu0
        %v475 = vadd.f32 %v227, %v474
        %v476 = vpop.f32.mrf.mxu0
        %477 = vmatprep.mubr.bf16.mxu0 0
        %478 = vmatmul.mubr.bf16.gmra.mxu0 %v341
        %v479 = vpop.f32.mrf.mxu0
        %v480 = vadd.f32 %v227, %v479
        %v481 = vpop.f32.mrf.mxu0
        %v482 = vpop.f32.mrf.mxu0
        %v483 = vadd.f32 %v227, %v482
        %v484 = vpop.f32.mrf.mxu0
        %485 = vmatprep.mubr.bf16.mxu0 0
        %486 = vmatmul.mubr.bf16.gmra.mxu0 %v344
        %v487 = vpop.f32.mrf.mxu0
        %v488 = vadd.f32 %v227, %v487
        %v489 = vpop.f32.mrf.mxu0
        %v490 = vpop.f32.mrf.mxu0
        %v491 = vadd.f32 %v227, %v490
        %v492 = vpop.f32.mrf.mxu0
        %493 = vmatprep.mubr.bf16.mxu0 0
        %494 = vmatmul.mubr.bf16.gmra.mxu0 %v347
        %v495 = vpop.f32.mrf.mxu0
        %v496 = vadd.f32 %v227, %v495
        %v497 = vpop.f32.mrf.mxu0
        %v498 = vpop.f32.mrf.mxu0
        %v499 = vadd.f32 %v227, %v498
        %v500 = vpop.f32.mrf.mxu0
        %501 = vmatprep.mubr.bf16.mxu0 0
        %502 = vmatmul.mubr.bf16.gmra.mxu0 %v350
        %v503 = vpop.f32.mrf.mxu0
        %v504 = vadd.f32 %v227, %v503
        %v505 = vpop.f32.mrf.mxu0
        %v506 = vpop.f32.mrf.mxu0
        %v507 = vadd.f32 %v227, %v506
        %v508 = vpop.f32.mrf.mxu0
        %509 = vmatprep.mubr.bf16.mxu0 0
        %510 = vmatmul.mubr.bf16.gmra.mxu0 %v353
        %v511 = vpop.f32.mrf.mxu0
        %v512 = vadd.f32 %v227, %v511
        %v513 = vpop.f32.mrf.mxu0
        %v514 = vpop.f32.mrf.mxu0
        %v515 = vadd.f32 %v227, %v514
        %v516 = vpop.f32.mrf.mxu0
        %517 = vmatprep.mubr.bf16.mxu0 0
        %518 = vmatmul.mubr.bf16.gmra.mxu0 %v356
        %v519 = vpop.f32.mrf.mxu0
        %v520 = vadd.f32 %v227, %v519
        %v521 = vpop.f32.mrf.mxu0
        %v522 = vpop.f32.mrf.mxu0
        %v523 = vadd.f32 %v227, %v522
        %v524 = vpop.f32.mrf.mxu0
        %525 = vdwg.mxu0
        %v526 = vmax.f32 %v400, 0.0
        %v527 = vmax.f32 %v403, 0.0
        %v528 = vmax.f32 %v408, 0.0
        %v529 = vmax.f32 %v411, 0.0
        %v530 = vmax.f32 %v416, 0.0
        %v531 = vmax.f32 %v419, 0.0
        %v532 = vmax.f32 %v424, 0.0
        %v533 = vmax.f32 %v427, 0.0
        %v534 = vmax.f32 %v432, 0.0
        %v535 = vmax.f32 %v435, 0.0
        %v536 = vmax.f32 %v440, 0.0
        %v537 = vmax.f32 %v443, 0.0
        %v538 = vmax.f32 %v448, 0.0
        %v539 = vmax.f32 %v451, 0.0
        %v540 = vmax.f32 %v456, 0.0
        %v541 = vmax.f32 %v459, 0.0
        %v542 = vmax.f32 %v464, 0.0
        %v543 = vmax.f32 %v467, 0.0
        %v544 = vmax.f32 %v472, 0.0
        %v545 = vmax.f32 %v475, 0.0
        %v546 = vmax.f32 %v480, 0.0
        %v547 = vmax.f32 %v483, 0.0
        %v548 = vmax.f32 %v488, 0.0
        %v549 = vmax.f32 %v491, 0.0
        %v550 = vmax.f32 %v496, 0.0
        %v551 = vmax.f32 %v499, 0.0
        %v552 = vmax.f32 %v504, 0.0
        %v553 = vmax.f32 %v507, 0.0
        %v554 = vmax.f32 %v512, 0.0
        %v555 = vmax.f32 %v515, 0.0
        %v556 = vmax.f32 %v520, 0.0
        %v557 = vmax.f32 %v523, 0.0
        %v558 = vpack.c.bf16 %v527, %v526
        %v559 = vpack.c.bf16 %v529, %v528
        %v560 = vpack.c.bf16 %v531, %v530
        %v561 = vpack.c.bf16 %v533, %v532
        %v562 = vpack.c.bf16 %v535, %v534
        %v563 = vpack.c.bf16 %v537, %v536
        %v564 = vpack.c.bf16 %v539, %v538
        %v565 = vpack.c.bf16 %v541, %v540
        %v566 = vpack.c.bf16 %v543, %v542
        %v567 = vpack.c.bf16 %v545, %v544
        %v568 = vpack.c.bf16 %v547, %v546
        %v569 = vpack.c.bf16 %v549, %v548
        %v570 = vpack.c.bf16 %v551, %v550
        %v571 = vpack.c.bf16 %v553, %v552
        %v572 = vpack.c.bf16 %v555, %v554
        %v573 = vpack.c.bf16 %v557, %v556
        %v590 = vunpack.c.l.b16 %v558
        %v591 = vunpack.c.h.b16 %v558
        %v592 = vunpack.c.l.b16 %v559
        %v593 = vunpack.c.h.b16 %v559
        %v594 = vunpack.c.l.b16 %v560
        %v595 = vunpack.c.h.b16 %v560
        %v596 = vunpack.c.l.b16 %v561
        %v597 = vunpack.c.h.b16 %v561
        %v598 = vunpack.c.l.b16 %v562
        %v599 = vunpack.c.h.b16 %v562
        %v600 = vunpack.c.l.b16 %v563
        %v601 = vunpack.c.h.b16 %v563
        %v602 = vunpack.c.l.b16 %v564
        %v603 = vunpack.c.h.b16 %v564
        %v604 = vunpack.c.l.b16 %v565
        %v605 = vunpack.c.h.b16 %v565
        %v606 = vunpack.c.l.b16 %v566
        %v607 = vunpack.c.h.b16 %v566
        %v608 = vunpack.c.l.b16 %v567
        %v609 = vunpack.c.h.b16 %v567
        %v610 = vunpack.c.l.b16 %v568
        %v611 = vunpack.c.h.b16 %v568
        %v612 = vunpack.c.l.b16 %v569
        %v613 = vunpack.c.h.b16 %v569
        %v614 = vunpack.c.l.b16 %v570
        %v615 = vunpack.c.h.b16 %v570
        %v616 = vunpack.c.l.b16 %v571
        %v617 = vunpack.c.h.b16 %v571
        %v618 = vunpack.c.l.b16 %v572
        %v619 = vunpack.c.h.b16 %v572
        %v620 = vunpack.c.l.b16 %v573
        %v621 = vunpack.c.h.b16 %v573
        %v622 = vpack.c.b16 %v590, %v590
        %v623 = vpack.c.b16 %v591, %v591
        %v624 = vpack.c.b16 %v592, %v592
        %v625 = vpack.c.b16 %v593, %v593
        %v626 = vpack.c.b16 %v594, %v594
        %v627 = vpack.c.b16 %v595, %v595
        %v628 = vpack.c.b16 %v596, %v596
        %v629 = vpack.c.b16 %v597, %v597
        %v630 = vpack.c.b16 %v598, %v598
        %v631 = vpack.c.b16 %v599, %v599
        %v632 = vpack.c.b16 %v600, %v600
        %v633 = vpack.c.b16 %v601, %v601
        %v634 = vpack.c.b16 %v602, %v602
        %v635 = vpack.c.b16 %v603, %v603
        %v636 = vpack.c.b16 %v604, %v604
        %v637 = vpack.c.b16 %v605, %v605
        %v638 = vpack.c.b16 %v606, %v606
        %v639 = vpack.c.b16 %v607, %v607
        %v640 = vpack.c.b16 %v608, %v608
        %v641 = vpack.c.b16 %v609, %v609
        %v642 = vpack.c.b16 %v610, %v610
        %v643 = vpack.c.b16 %v611, %v611
        %v644 = vpack.c.b16 %v612, %v612
        %v645 = vpack.c.b16 %v613, %v613
        %v646 = vpack.c.b16 %v614, %v614
        %v647 = vpack.c.b16 %v615, %v615
        %v648 = vpack.c.b16 %v616, %v616
        %v649 = vpack.c.b16 %v617, %v617
        %v650 = vpack.c.b16 %v618, %v618
        %v651 = vpack.c.b16 %v619, %v619
        %v652 = vpack.c.b16 %v620, %v620
        %v653 = vpack.c.b16 %v621, %v621
        %vm686 = vcmask 519168
        %687 = vst.msk [vmem:[%s177] sm:$0xf] %vm686, %v622
        %688 = vst.msk [vmem:[%s177 + $0x4] sm:$0xf] %vm686, %v623
        %689 = vst.msk [vmem:[%s177 + $0x8] sm:$0xf] %vm686, %v624
        %690 = vst.msk [vmem:[%s177 + $0xc] sm:$0xf] %vm686, %v625
        %691 = vst.msk [vmem:[%s177 + $0x10] sm:$0xf] %vm686, %v626
        %692 = vst.msk [vmem:[%s177 + $0x14] sm:$0xf] %vm686, %v627
        %693 = vst.msk [vmem:[%s177 + $0x18] sm:$0xf] %vm686, %v628
        %694 = vst.msk [vmem:[%s177 + $0x1c] sm:$0xf] %vm686, %v629
        %695 = vst.msk [vmem:[%s177 + $0x20] sm:$0xf] %vm686, %v630
        %696 = vst.msk [vmem:[%s177 + $0x24] sm:$0xf] %vm686, %v631
        %697 = vst.msk [vmem:[%s177 + $0x28] sm:$0xf] %vm686, %v632
        %698 = vst.msk [vmem:[%s177 + $0x2c] sm:$0xf] %vm686, %v633
        %699 = vst.msk [vmem:[%s177 + $0x30] sm:$0xf] %vm686, %v634
        %700 = vst.msk [vmem:[%s177 + $0x34] sm:$0xf] %vm686, %v635
        %701 = vst.msk [vmem:[%s177 + $0x38] sm:$0xf] %vm686, %v636
        %702 = vst.msk [vmem:[%s177 + $0x3c] sm:$0xf] %vm686, %v637
        %703 = vst.msk [vmem:[%s177 + $0x40] sm:$0xf] %vm686, %v638
        %704 = vst.msk [vmem:[%s177 + $0x44] sm:$0xf] %vm686, %v639
        %705 = vst.msk [vmem:[%s177 + $0x48] sm:$0xf] %vm686, %v640
        %706 = vst.msk [vmem:[%s177 + $0x4c] sm:$0xf] %vm686, %v641
        %707 = vst.msk [vmem:[%s177 + $0x50] sm:$0xf] %vm686, %v642
        %708 = vst.msk [vmem:[%s177 + $0x54] sm:$0xf] %vm686, %v643
        %709 = vst.msk [vmem:[%s177 + $0x58] sm:$0xf] %vm686, %v644
        %710 = vst.msk [vmem:[%s177 + $0x5c] sm:$0xf] %vm686, %v645
        %711 = vst.msk [vmem:[%s177 + $0x60] sm:$0xf] %vm686, %v646
        %712 = vst.msk [vmem:[%s177 + $0x64] sm:$0xf] %vm686, %v647
        %713 = vst.msk [vmem:[%s177 + $0x68] sm:$0xf] %vm686, %v648
        %714 = vst.msk [vmem:[%s177 + $0x6c] sm:$0xf] %vm686, %v649
        %715 = vst.msk [vmem:[%s177 + $0x70] sm:$0xf] %vm686, %v650
        %716 = vst.msk [vmem:[%s177 + $0x74] sm:$0xf] %vm686, %v651
        %717 = vst.msk [vmem:[%s177 + $0x78] sm:$0xf] %vm686, %v652
        %718 = vst.msk [vmem:[%s177 + $0x7c] sm:$0xf] %vm686, %v653
        %s719 = sand.u32 %s107, 1
        %s720 = scalar_lea.sflag [#allocation3], %s719
        %s721 = sand.u32 %s107, 1
        %s722 = smul.addr %s721, 128
        %s723 = scalar_lea.vmem [#allocation2], %s722
        // Predicated region
        $region33: #{tpu_custom_call.1} parent=31 // pred_check
          %p724 = pneg %p117
        $region34: #{tpu_custom_call.1} parent=31 // pred_check_branch
          %726 = sbr.rel (%p724) target = $region36
        $region35: #{tpu_custom_call.1} parent=31 // pred_region
          %s727 = smul.u32 16, %s22
          %s729 = ssub.s32 2048, 2048
          %730 = vsyncadd %s720, %s729
          %s731 = smul.addr %s727, 2
          %s732 = smul.addr %s21, 32
          %s733 = sadd.s32 %s731, %s732
          %s734 = smul.addr %s733, 64
          %s735 = scalar_lea.hbm %s3, %s734
          %s736 = sshll.u32 %s723, 4
          %s737 = int_to_ptr.vmem [resolvable:$true] %s736
          %742 = dma.vmem_to_hbm [thread:$0]  %s737, 2048, %s735, %s720, 64, 64, 4
        $region36: #{tpu_custom_call.1} parent=31 // pred_fallthru
          _
      $region32: #{tpu_custom_call.1} parent=5 // pred_fallthru
        _
      %p743 = scmp.le.s32.totalorder 2, %s12
      // Predicated region
      $region37: #{tpu_custom_call.1} parent=5 // pred_check
        %p744 = pneg %p743
      $region38: #{tpu_custom_call.1} parent=5 // pred_check_branch
        %746 = sbr.rel (%p744) target = $region40
      $region39: #{tpu_custom_call.1} parent=5 // pred_region
        %s747 = ssub.s32 %s12, 2
        // Predicated region
        $region41: #{tpu_custom_call.1} parent=39 // pred_check
          %p748 = pneg %p123
        $region42: #{tpu_custom_call.1} parent=39 // pred_check_branch
          %750 = sbr.rel (%p748) target = $region44
        $region43: #{tpu_custom_call.1} parent=39 // pred_region
          %s751 = sand.u32 %s108, 1
          %s752 = scalar_lea.sflag [#allocation3], %s751
          %s753 = sand.u32 %s108, 1
          %s754 = smul.addr %s753, 128
          %s755 = scalar_lea.vmem [#allocation2], %s754
          %756 = dma.done %s752, 2048
        $region44: #{tpu_custom_call.1} parent=39 // pred_fallthru
          _
      $region40: #{tpu_custom_call.1} parent=5 // pred_fallthru
        _
    $region6: #{tpu_custom_call.1} parent=1 // loop_footer
      %s16 = sadd.s32 1, %s12
    $region7: #{tpu_custom_call.1} parent=1 // loop_footer_branch
      %11 = sbr.rel target = $region3
    $region8: #{tpu_custom_call.1} parent=1 // loop_exit
      _
    %757 = vsyncpa [#allocation3], 1
    %s758 = scalar_lea.sflag [#allocation3], 1
    %759 = vsyncpa %s758, 1

// kernel: tpu_custom_call.1
$region0: #{tpu_custom_call.1}
  #allocation0 [shape = 'u32[]', space=smem, size = 0x4, offset = 0x4, fixed_abs, tag = 'smem constant byte address 0x4 - core index']
  #allocation1 [shape = 'u32[144,128]{1,0:T(1,128)}', space=vmem, size = 0x12000, scoped, tag = 'internal scratch']
  %s0 = inlined_call_operand.vmem [shape: bf16[2,17,16,3], index: 0, kind: input, shape index: {}]
  %s1 = inlined_call_operand.vmem [shape: bf16[1,1,3,64], index: 1, kind: input, shape index: {}]
  %s2 = inlined_call_operand.vmem [shape: f32[1,64], index: 2, kind: input, shape index: {}]
  %s3 = inlined_call_operand.hbm [shape: bf16[2,16,16,64], index: 3, kind: output, shape index: {}]
  %s4 = sld [smem:[#allocation0]]
  $region45: #{tpu_custom_call.1} parent=0
    _
  %s6 = ssub.s32 1, %s4
  %s7 = scalar_select 0, %s6, %s4
  $region1: #{tpu_custom_call.1} parent=0
    #allocation2 [shape = 'u8[131072]{0}', space=vmem, size = 0x20000, scoped, tag = 'output window, operand 0']
    #allocation3 [shape = 's32[2]{0}', space=sflag, size = 0x8, scoped, tag = 'scoped memory for tpu_custom_call.1']
    %8 = vsyncpa [#allocation3], 0
    %s9 = scalar_lea.sflag [#allocation3], 1
    %10 = vsyncpa %s9, 0
    loop: start=0, step=1, limit=4
    $region2: #{tpu_custom_call.1} parent=1 // loop_pre_header
      _
    $region3: #{tpu_custom_call.1} parent=1 // loop_header
      %s12 = sphi 0, %s16
      %p13 = scmp.ge.s32.totalorder %s12, 4
      %s19 = sphi 0, %s31
      %s20 = sphi 0, %s27
      %s21 = sphi 0, %s19
      %s22 = sphi 0, %s20
      %s23 = sphi 0, %s21
      %s24 = sphi 0, %s22
      %s34 = sphi 0, %s36
      %s37 = sphi 0, %s34
      %s38 = sphi 0, %s37
      %s54 = sphi 0, %s38
      %s58 = sphi 0, %s58
      %s60 = sphi 0, %s58
      %s61 = sphi 0, %s60
      %s75 = sphi 0, %s61
      %s79 = sphi 0, %s79
      %s81 = sphi 0, %s79
      %s82 = sphi 0, %s81
      %s96 = sphi 0, %s82
      %s104 = sphi 0, %s106
      %s107 = sphi 0, %s104
      %s108 = sphi 0, %s107
      %s124 = sphi 0, %s108
    $region4: #{tpu_custom_call.1} parent=1 // loop_header_branch
      %15 = sbr.rel (%p13) target = $region8
    $region5: #{tpu_custom_call.1} parent=1 // loop_body
      %s17 = ssub.s32 %s12, 1
      %s18 = ssub.s32 %s12, 2
      %s25 = sadd.s32 1, %s20
      %p26 = scmp.ge.s32.totalorder %s25, 1
      %s27 = scalar_select %p26, 0, %s25
      %s28 = sadd.s32 1, %s19
      %s29 = scalar_select %p26, %s28, %s19
      %p30 = scmp.ge.s32.totalorder %s29, 2
      %s31 = scalar_select %p30, 0, %s29
      %s32 = ssub.s32 %s19, %s31
      %p33 = scmp.eq.s32.totalorder %s32, 0
      %s35 = sadd.s32 %s34, 1
      %s36 = scalar_select %p33, %s34, %s35
      %p39 = pneg %p33
      %p40 = scmp.eq.s32.totalorder %s12, 1
      %p41 = por %p39, %p40
      %p42 = scmp.ne.s32.totalorder %s34, %s37
      %p43 = scmp.eq.s32.totalorder %s12, 0
      %p44 = por %p42, %p43
      %p45 = scmp.ne.s32.totalorder %s34, %s37
      %p46 = scmp.eq.s32.totalorder %s17, 1
      %p47 = por %p45, %p46
      %p48 = scmp.ne.s32.totalorder %s37, %s38
      %p49 = scmp.eq.s32.totalorder %s17, 0
      %p50 = por %p48, %p49
      %p51 = scmp.ne.s32.totalorder %s37, %s38
      %p52 = scmp.eq.s32.totalorder %s18, 1
      %p53 = por %p51, %p52
      %p55 = scmp.ne.s32.totalorder %s38, %s54
      %p56 = scmp.eq.s32.totalorder %s18, 0
      %p57 = por %p55, %p56
      %s59 = sadd.s32 %s58, 1
      %p62 = scmp.eq.s32.totalorder %s12, 1
      %p63 = scmp.ne.s32.totalorder %s58, %s60
      %p64 = scmp.eq.s32.totalorder %s12, 0
      %p65 = por %p63, %p64
      %p66 = scmp.ne.s32.totalorder %s58, %s60
      %p67 = scmp.eq.s32.totalorder %s17, 1
      %p68 = por %p66, %p67
      %p69 = scmp.ne.s32.totalorder %s60, %s61
      %p70 = scmp.eq.s32.totalorder %s17, 0
      %p71 = por %p69, %p70
      %p72 = scmp.ne.s32.totalorder %s60, %s61
      %p73 = scmp.eq.s32.totalorder %s18, 1
      %p74 = por %p72, %p73
      %p76 = scmp.ne.s32.totalorder %s61, %s75
      %p77 = scmp.eq.s32.totalorder %s18, 0
      %p78 = por %p76, %p77
      %s80 = sadd.s32 %s79, 1
      %p83 = scmp.eq.s32.totalorder %s12, 1
      %p84 = scmp.ne.s32.totalorder %s79, %s81
      %p85 = scmp.eq.s32.totalorder %s12, 0
      %p86 = por %p84, %p85
      %p87 = scmp.ne.s32.totalorder %s79, %s81
      %p88 = scmp.eq.s32.totalorder %s17, 1
      %p89 = por %p87, %p88
      %p90 = scmp.ne.s32.totalorder %s81, %s82
      %p91 = scmp.eq.s32.totalorder %s17, 0
      %p92 = por %p90, %p91
      %p93 = scmp.ne.s32.totalorder %s81, %s82
      %p94 = scmp.eq.s32.totalorder %s18, 1
      %p95 = por %p93, %p94
      %p97 = scmp.ne.s32.totalorder %s82, %s96
      %p98 = scmp.eq.s32.totalorder %s18, 0
      %p99 = por %p97, %p98
      %s100 = ssub.s32 %s19, %s31
      %s101 = ssub.s32 %s20, %s27
      %s102 = sor.u32 %s100, %s101
      %p103 = scmp.eq.s32.totalorder %s102, 0
      %s105 = sadd.s32 %s104, 1
      %s106 = scalar_select %p103, %s104, %s105
      %p109 = pneg %p103
      %p110 = scmp.eq.s32.totalorder %s12, 1
      %p111 = por %p109, %p110
      %p112 = scmp.ne.s32.totalorder %s104, %s107
      %p113 = scmp.eq.s32.totalorder %s12, 0
      %p114 = por %p112, %p113
      %p115 = scmp.ne.s32.totalorder %s104, %s107
      %p116 = scmp.eq.s32.totalorder %s17, 1
      %p117 = por %p115, %p116
      %p118 = scmp.ne.s32.totalorder %s107, %s108
      %p119 = scmp.eq.s32.totalorder %s17, 0
      %p120 = por %p118, %p119
      %p121 = scmp.ne.s32.totalorder %s107, %s108
      %p122 = scmp.eq.s32.totalorder %s18, 1
      %p123 = por %p121, %p122
      %p125 = scmp.ne.s32.totalorder %s108, %s124
      %p126 = scmp.eq.s32.totalorder %s18, 0
      %p127 = por %p125, %p126
      %p128 = scmp.le.s32.totalorder 1, %s12
      %p129 = scmp.lt.s32.totalorder %s12, 3
      %p130 = pnand %p128, %p129
      %p131 = pneg %p130
      // Predicated region
      $region9: #{tpu_custom_call.1} parent=5 // pred_check
        _
      $region10: #{tpu_custom_call.1} parent=5 // pred_check_branch
        %133 = sbr.rel (%p130) target = $region12
      $region11: #{tpu_custom_call.1} parent=5 // pred_region
        %s134 = ssub.s32 %s12, 1
        // Predicated region
        $region13: #{tpu_custom_call.1} parent=11 // pred_check
          %p135 = pneg %p71
        $region14: #{tpu_custom_call.1} parent=11 // pred_check_branch
          %137 = sbr.rel (%p135) target = $region16
        $region15: #{tpu_custom_call.1} parent=11 // pred_region
          _
        $region16: #{tpu_custom_call.1} parent=11 // pred_fallthru
          _
        // Predicated region
        $region17: #{tpu_custom_call.1} parent=11 // pred_check
          %p138 = pneg %p92
        $region18: #{tpu_custom_call.1} parent=11 // pred_check_branch
          %140 = sbr.rel (%p138) target = $region20
        $region19: #{tpu_custom_call.1} parent=11 // pred_region
          _
        $region20: #{tpu_custom_call.1} parent=11 // pred_fallthru
          _
      $region12: #{tpu_custom_call.1} parent=5 // pred_fallthru
        _
      %p141 = scmp.lt.s32.totalorder %s12, 2
      // Predicated region
      $region21: #{tpu_custom_call.1} parent=5 // pred_check
        %p142 = pneg %p141
      $region22: #{tpu_custom_call.1} parent=5 // pred_check_branch
        %144 = sbr.rel (%p142) target = $region24
      $region23: #{tpu_custom_call.1} parent=5 // pred_region
        // Predicated region
        $region25: #{tpu_custom_call.1} parent=23 // pred_check
          %p145 = pneg %p44
        $region26: #{tpu_custom_call.1} parent=23 // pred_check_branch
          %147 = sbr.rel (%p145) target = $region28
        $region27: #{tpu_custom_call.1} parent=23 // pred_region
          %p148 = scmp.lt.s32.totalorder %s19, 1
          %s149 = scalar_select %p148, %s19, 1
          %s150 = smul.addr %s149, 34
          %s151 = smul.addr %s150, 4
          %s152 = scalar_lea.vmem %s0, %s151
        $region28: #{tpu_custom_call.1} parent=23 // pred_fallthru
          _
      $region24: #{tpu_custom_call.1} parent=5 // pred_fallthru
        _
      %p153 = scmp.le.s32.totalorder 1, %s12
      %p154 = scmp.lt.s32.totalorder %s12, 3
      %p155 = pnand %p153, %p154
      %p156 = pneg %p155
      // Predicated region
      $region29: #{tpu_custom_call.1} parent=5 // pred_check
        _
      $region30: #{tpu_custom_call.1} parent=5 // pred_check_branch
        %158 = sbr.rel (%p155) target = $region32
      $region31: #{tpu_custom_call.1} parent=5 // pred_region
        %s159 = ssub.s32 %s12, 1
        %p160 = scmp.lt.s32.totalorder %s21, 1
        %s161 = scalar_select %p160, %s21, 1
        %s162 = smul.addr %s161, 34
        %s163 = smul.addr %s162, 4
        %s164 = scalar_lea.vmem %s0, %s163
        %p165 = pneg %p50
        %p166 = pneg %p47
        %p167 = pneg %p71
        %p168 = pneg %p68
        %p169 = pneg %p92
        %p170 = pneg %p89
        %p171 = pneg %p120
        %p172 = pneg %p117
        %s173 = sand.u32 %s107, 1
        %s174 = scalar_lea.sflag [#allocation3], %s173
        %s175 = sand.u32 %s107, 1
        %s176 = smul.addr %s175, 128
        %s177 = scalar_lea.vmem [#allocation2], %s176
        %p178 = scmp.lt.s32.totalorder %s21, 1
        %s179 = scalar_select %p178, %s21, 1
        %s180 = smul.addr %s179, 34
        %s181 = smul.addr %s180, 4
        %s182 = scalar_lea.vmem %s0, %s181
        %s183 = smul.u32 16, %s22
        %s185 = smul.u32 %s22, 16
        %s186 = smul.u32 %s185, 2
        %s187 = smul.addr %s186, 4
        %s188 = scalar_lea.vmem %s182, %s187
        %v189 = vld [vmem:[%s188] sm:$0xf]
        %v190 = vld [vmem:[%s188 + $0x4] sm:$0xf]
        %v191 = vld [vmem:[%s188 + $0x8] sm:$0xf]
        %v192 = vld [vmem:[%s188 + $0xc] sm:$0xf]
        %v193 = vld [vmem:[%s188 + $0x10] sm:$0xf]
        %v194 = vld [vmem:[%s188 + $0x14] sm:$0xf]
        %v195 = vld [vmem:[%s188 + $0x18] sm:$0xf]
        %v196 = vld [vmem:[%s188 + $0x1c] sm:$0xf]
        %v197 = vld [vmem:[%s188 + $0x20] sm:$0xf]
        %v198 = vld [vmem:[%s188 + $0x24] sm:$0xf]
        %v199 = vld [vmem:[%s188 + $0x28] sm:$0xf]
        %v200 = vld [vmem:[%s188 + $0x2c] sm:$0xf]
        %v201 = vld [vmem:[%s188 + $0x30] sm:$0xf]
        %v202 = vld [vmem:[%s188 + $0x34] sm:$0xf]
        %v203 = vld [vmem:[%s188 + $0x38] sm:$0xf]
        %v204 = vld [vmem:[%s188 + $0x3c] sm:$0xf]
        %v205 = vld [vmem:[%s188 + $0x40] sm:$0xf]
        %v206 = vld [vmem:[%s188 + $0x44] sm:$0xf]
        %v207 = vld [vmem:[%s188 + $0x48] sm:$0xf]
        %v208 = vld [vmem:[%s188 + $0x4c] sm:$0xf]
        %v209 = vld [vmem:[%s188 + $0x50] sm:$0xf]
        %v210 = vld [vmem:[%s188 + $0x54] sm:$0xf]
        %v211 = vld [vmem:[%s188 + $0x58] sm:$0xf]
        %v212 = vld [vmem:[%s188 + $0x5c] sm:$0xf]
        %v213 = vld [vmem:[%s188 + $0x60] sm:$0xf]
        %v214 = vld [vmem:[%s188 + $0x64] sm:$0xf]
        %v215 = vld [vmem:[%s188 + $0x68] sm:$0xf]
        %v216 = vld [vmem:[%s188 + $0x6c] sm:$0xf]
        %v217 = vld [vmem:[%s188 + $0x70] sm:$0xf]
        %v218 = vld [vmem:[%s188 + $0x74] sm:$0xf]
        %v219 = vld [vmem:[%s188 + $0x78] sm:$0xf]
        %v220 = vld [vmem:[%s188 + $0x7c] sm:$0xf]
        %v221 = vld [vmem:[%s1] sm:$0x3]
        %v222 = vld [vmem:[%s2] sm:$0x1]
        %v224 = vlaneseq
        %v225 = vshrl.u32 %v224, 7
        %v226 = vsub.s32 0, %v225
        %v227 = vrot.slane %v222, %v226
        %v261 = vunpack.c.l.b16 %v189
        %v262 = vunpack.c.l.b16 %v190
        %v263 = vunpack.c.l.b16 %v191
        %v264 = vunpack.c.l.b16 %v192
        %v265 = vunpack.c.l.b16 %v193
        %v266 = vunpack.c.l.b16 %v194
        %v267 = vunpack.c.l.b16 %v195
        %v268 = vunpack.c.l.b16 %v196
        %v269 = vunpack.c.l.b16 %v197
        %v270 = vunpack.c.l.b16 %v198
        %v271 = vunpack.c.l.b16 %v199
        %v272 = vunpack.c.l.b16 %v200
        %v273 = vunpack.c.l.b16 %v201
        %v274 = vunpack.c.l.b16 %v202
        %v275 = vunpack.c.l.b16 %v203
        %v276 = vunpack.c.l.b16 %v204
        %v277 = vunpack.c.l.b16 %v205
        %v278 = vunpack.c.l.b16 %v206
        %v279 = vunpack.c.l.b16 %v207
        %v280 = vunpack.c.l.b16 %v208
        %v281 = vunpack.c.l.b16 %v209
        %v282 = vunpack.c.l.b16 %v210
        %v283 = vunpack.c.l.b16 %v211
        %v284 = vunpack.c.l.b16 %v212
        %v285 = vunpack.c.l.b16 %v213
        %v286 = vunpack.c.l.b16 %v214
        %v287 = vunpack.c.l.b16 %v215
        %v288 = vunpack.c.l.b16 %v216
        %v289 = vunpack.c.l.b16 %v217
        %v290 = vunpack.c.l.b16 %v218
        %v291 = vunpack.c.l.b16 %v219
        %v292 = vunpack.c.l.b16 %v220
        %v293 = vpack.c.b16 %v262, %v261
        %v294 = vpack.c.b16 %v264, %v263
        %v295 = vpack.c.b16 %v266, %v265
        %v296 = vpack.c.b16 %v268, %v267
        %v297 = vpack.c.b16 %v270, %v269
        %v298 = vpack.c.b16 %v272, %v271
        %v299 = vpack.c.b16 %v274, %v273
        %v300 = vpack.c.b16 %v276, %v275
        %v301 = vpack.c.b16 %v278, %v277
        %v302 = vpack.c.b16 %v280, %v279
        %v303 = vpack.c.b16 %v282, %v281
        %v304 = vpack.c.b16 %v284, %v283
        %v305 = vpack.c.b16 %v286, %v285
        %v306 = vpack.c.b16 %v288, %v287
        %v307 = vpack.c.b16 %v290, %v289
        %v308 = vpack.c.b16 %v292, %v291
        %vm309 = vcmask 23552
        %v311 = vsel %vm309, %v293, 0
        %v314 = vsel %vm309, %v294, 0
        %v317 = vsel %vm309, %v295, 0
        %v320 = vsel %vm309, %v296, 0
        %v323 = vsel %vm309, %v297, 0
        %v326 = vsel %vm309, %v298, 0
        %v329 = vsel %vm309, %v299, 0
        %v332 = vsel %vm309, %v300, 0
        %v335 = vsel %vm309, %v301, 0
        %v338 = vsel %vm309, %v302, 0
        %v341 = vsel %vm309, %v303, 0
        %v344 = vsel %vm309, %v304, 0
        %v347 = vsel %vm309, %v305, 0
        %v350 = vsel %vm309, %v306, 0
        %v353 = vsel %vm309, %v307, 0
        %v356 = vsel %vm309, %v308, 0
        %vm358 = vcmask 1040384
        %vm359 = vcmask 1041408
        %v360 = vsel %vm358, 4294967295, 65535
        %v361 = vsel %vm359, %v360, 0
        %v363 = vand.u32 %v221, %v361
        %365 = vmatprep.subr.bf16.mxu0 0
        %366 = vmatpush1.bf16.msra.mxu0 0
        %367 = vmatprep.subr.bf16.mxu0 0
        %368 = vmatpush1.bf16.msra.mxu0 0
        %369 = vmatprep.subr.bf16.mxu0 0
        %370 = vmatpush1.bf16.msra.mxu0 0
        %371 = vmatprep.subr.bf16.mxu0 0
        %372 = vmatpush1.bf16.msra.mxu0 0
        %373 = vmatprep.subr.bf16.mxu0 0
        %374 = vmatpush1.bf16.msra.mxu0 0
        %375 = vmatprep.subr.bf16.mxu0 0
        %376 = vmatpush1.bf16.msra.mxu0 0
        %377 = vmatprep.subr.bf16.mxu0 0
        %378 = vmatpush1.bf16.msra.mxu0 0
        %379 = vmatprep.subr.bf16.mxu0 0
        %380 = vmatpush1.bf16.msra.mxu0 %v363
        %381 = vmatprep.subr.bf16.mxu0 0
        %382 = vmatpush2.bf16.msra.mxu0 0
        %383 = vmatprep.subr.bf16.mxu0 0
        %384 = vmatpush2.bf16.msra.mxu0 0
        %385 = vmatprep.subr.bf16.mxu0 0
        %386 = vmatpush2.bf16.msra.mxu0 0
        %387 = vmatprep.subr.bf16.mxu0 0
        %388 = vmatpush2.bf16.msra.mxu0 0
        %389 = vmatprep.subr.bf16.mxu0 0
        %390 = vmatpush2.bf16.msra.mxu0 0
        %391 = vmatprep.subr.bf16.mxu0 0
        %392 = vmatpush2.bf16.msra.mxu0 0
        %393 = vmatprep.subr.bf16.mxu0 0
        %394 = vmatpush2.bf16.msra.mxu0 0
        %395 = vmatprep.subr.bf16.mxu0 0
        %396 = vmatpush2.bf16.msra.mxu0 0
        %397 = vmatprep.mubr.bf16.mxu0 0
        %398 = vmatmul.mubr.bf16.gmra.mxu0 %v311
        %v399 = vpop.f32.mrf.mxu0
        %v400 = vadd.f32 %v227, %v399
        %v401 = vpop.f32.mrf.mxu0
        %v402 = vpop.f32.mrf.mxu0
        %v403 = vadd.f32 %v227, %v402
        %v404 = vpop.f32.mrf.mxu0
        %405 = vmatprep.mubr.bf16.mxu0 0
        %406 = vmatmul.mubr.bf16.gmra.mxu0 %v314
        %v407 = vpop.f32.mrf.mxu0
        %v408 = vadd.f32 %v227, %v407
        %v409 = vpop.f32.mrf.mxu0
        %v410 = vpop.f32.mrf.mxu0
        %v411 = vadd.f32 %v227, %v410
        %v412 = vpop.f32.mrf.mxu0
        %413 = vmatprep.mubr.bf16.mxu0 0
        %414 = vmatmul.mubr.bf16.gmra.mxu0 %v317
        %v415 = vpop.f32.mrf.mxu0
        %v416 = vadd.f32 %v227, %v415
        %v417 = vpop.f32.mrf.mxu0
        %v418 = vpop.f32.mrf.mxu0
        %v419 = vadd.f32 %v227, %v418
        %v420 = vpop.f32.mrf.mxu0
        %421 = vmatprep.mubr.bf16.mxu0 0
        %422 = vmatmul.mubr.bf16.gmra.mxu0 %v320
        %v423 = vpop.f32.mrf.mxu0
        %v424 = vadd.f32 %v227, %v423
        %v425 = vpop.f32.mrf.mxu0
        %v426 = vpop.f32.mrf.mxu0
        %v427 = vadd.f32 %v227, %v426
        %v428 = vpop.f32.mrf.mxu0
        %429 = vmatprep.mubr.bf16.mxu0 0
        %430 = vmatmul.mubr.bf16.gmra.mxu0 %v323
        %v431 = vpop.f32.mrf.mxu0
        %v432 = vadd.f32 %v227, %v431
        %v433 = vpop.f32.mrf.mxu0
        %v434 = vpop.f32.mrf.mxu0
        %v435 = vadd.f32 %v227, %v434
        %v436 = vpop.f32.mrf.mxu0
        %437 = vmatprep.mubr.bf16.mxu0 0
        %438 = vmatmul.mubr.bf16.gmra.mxu0 %v326
        %v439 = vpop.f32.mrf.mxu0
        %v440 = vadd.f32 %v227, %v439
        %v441 = vpop.f32.mrf.mxu0
        %v442 = vpop.f32.mrf.mxu0
        %v443 = vadd.f32 %v227, %v442
        %v444 = vpop.f32.mrf.mxu0
        %445 = vmatprep.mubr.bf16.mxu0 0
        %446 = vmatmul.mubr.bf16.gmra.mxu0 %v329
        %v447 = vpop.f32.mrf.mxu0
        %v448 = vadd.f32 %v227, %v447
        %v449 = vpop.f32.mrf.mxu0
        %v450 = vpop.f32.mrf.mxu0
        %v451 = vadd.f32 %v227, %v450
        %v452 = vpop.f32.mrf.mxu0
        %453 = vmatprep.mubr.bf16.mxu0 0
        %454 = vmatmul.mubr.bf16.gmra.mxu0 %v332
        %v455 = vpop.f32.mrf.mxu0
        %v456 = vadd.f32 %v227, %v455
        %v457 = vpop.f32.mrf.mxu0
        %v458 = vpop.f32.mrf.mxu0
        %v459 = vadd.f32 %v227, %v458
        %v460 = vpop.f32.mrf.mxu0
        %461 = vmatprep.mubr.bf16.mxu0 0
        %462 = vmatmul.mubr.bf16.gmra.mxu0 %v335
        %v463 = vpop.f32.mrf.mxu0
        %v464 = vadd.f32 %v227, %v463
        %v465 = vpop.f32.mrf.mxu0
        %v466 = vpop.f32.mrf.mxu0
        %v467 = vadd.f32 %v227, %v466
        %v468 = vpop.f32.mrf.mxu0
        %469 = vmatprep.mubr.bf16.mxu0 0
        %470 = vmatmul.mubr.bf16.gmra.mxu0 %v338
        %v471 = vpop.f32.mrf.mxu0
        %v472 = vadd.f32 %v227, %v471
        %v473 = vpop.f32.mrf.mxu0
        %v474 = vpop.f32.mrf.mxu0
        %v475 = vadd.f32 %v227, %v474
        %v476 = vpop.f32.mrf.mxu0
        %477 = vmatprep.mubr.bf16.mxu0 0
        %478 = vmatmul.mubr.bf16.gmra.mxu0 %v341
        %v479 = vpop.f32.mrf.mxu0
        %v480 = vadd.f32 %v227, %v479
        %v481 = vpop.f32.mrf.mxu0
        %v482 = vpop.f32.mrf.mxu0
        %v483 = vadd.f32 %v227, %v482
        %v484 = vpop.f32.mrf.mxu0
        %485 = vmatprep.mubr.bf16.mxu0 0
        %486 = vmatmul.mubr.bf16.gmra.mxu0 %v344
        %v487 = vpop.f32.mrf.mxu0
        %v488 = vadd.f32 %v227, %v487
        %v489 = vpop.f32.mrf.mxu0
        %v490 = vpop.f32.mrf.mxu0
        %v491 = vadd.f32 %v227, %v490
        %v492 = vpop.f32.mrf.mxu0
        %493 = vmatprep.mubr.bf16.mxu0 0
        %494 = vmatmul.mubr.bf16.gmra.mxu0 %v347
        %v495 = vpop.f32.mrf.mxu0
        %v496 = vadd.f32 %v227, %v495
        %v497 = vpop.f32.mrf.mxu0
        %v498 = vpop.f32.mrf.mxu0
        %v499 = vadd.f32 %v227, %v498
        %v500 = vpop.f32.mrf.mxu0
        %501 = vmatprep.mubr.bf16.mxu0 0
        %502 = vmatmul.mubr.bf16.gmra.mxu0 %v350
        %v503 = vpop.f32.mrf.mxu0
        %v504 = vadd.f32 %v227, %v503
        %v505 = vpop.f32.mrf.mxu0
        %v506 = vpop.f32.mrf.mxu0
        %v507 = vadd.f32 %v227, %v506
        %v508 = vpop.f32.mrf.mxu0
        %509 = vmatprep.mubr.bf16.mxu0 0
        %510 = vmatmul.mubr.bf16.gmra.mxu0 %v353
        %v511 = vpop.f32.mrf.mxu0
        %v512 = vadd.f32 %v227, %v511
        %v513 = vpop.f32.mrf.mxu0
        %v514 = vpop.f32.mrf.mxu0
        %v515 = vadd.f32 %v227, %v514
        %v516 = vpop.f32.mrf.mxu0
        %517 = vmatprep.mubr.bf16.mxu0 0
        %518 = vmatmul.mubr.bf16.gmra.mxu0 %v356
        %v519 = vpop.f32.mrf.mxu0
        %v520 = vadd.f32 %v227, %v519
        %v521 = vpop.f32.mrf.mxu0
        %v522 = vpop.f32.mrf.mxu0
        %v523 = vadd.f32 %v227, %v522
        %v524 = vpop.f32.mrf.mxu0
        %525 = vdwg.mxu0
        %v526 = vmax.f32 %v400, 0.0
        %v527 = vmax.f32 %v403, 0.0
        %v528 = vmax.f32 %v408, 0.0
        %v529 = vmax.f32 %v411, 0.0
        %v530 = vmax.f32 %v416, 0.0
        %v531 = vmax.f32 %v419, 0.0
        %v532 = vmax.f32 %v424, 0.0
        %v533 = vmax.f32 %v427, 0.0
        %v534 = vmax.f32 %v432, 0.0
        %v535 = vmax.f32 %v435, 0.0
        %v536 = vmax.f32 %v440, 0.0
        %v537 = vmax.f32 %v443, 0.0
        %v538 = vmax.f32 %v448, 0.0
        %v539 = vmax.f32 %v451, 0.0
        %v540 = vmax.f32 %v456, 0.0
        %v541 = vmax.f32 %v459, 0.0
        %v542 = vmax.f32 %v464, 0.0
        %v543 = vmax.f32 %v467, 0.0
        %v544 = vmax.f32 %v472, 0.0
        %v545 = vmax.f32 %v475, 0.0
        %v546 = vmax.f32 %v480, 0.0
        %v547 = vmax.f32 %v483, 0.0
        %v548 = vmax.f32 %v488, 0.0
        %v549 = vmax.f32 %v491, 0.0
        %v550 = vmax.f32 %v496, 0.0
        %v551 = vmax.f32 %v499, 0.0
        %v552 = vmax.f32 %v504, 0.0
        %v553 = vmax.f32 %v507, 0.0
        %v554 = vmax.f32 %v512, 0.0
        %v555 = vmax.f32 %v515, 0.0
        %v556 = vmax.f32 %v520, 0.0
        %v557 = vmax.f32 %v523, 0.0
        %v558 = vpack.c.bf16 %v527, %v526
        %v559 = vpack.c.bf16 %v529, %v528
        %v560 = vpack.c.bf16 %v531, %v530
        %v561 = vpack.c.bf16 %v533, %v532
        %v562 = vpack.c.bf16 %v535, %v534
        %v563 = vpack.c.bf16 %v537, %v536
        %v564 = vpack.c.bf16 %v539, %v538
        %v565 = vpack.c.bf16 %v541, %v540
        %v566 = vpack.c.bf16 %v543, %v542
        %v567 = vpack.c.bf16 %v545, %v544
        %v568 = vpack.c.bf16 %v547, %v546
        %v569 = vpack.c.bf16 %v549, %v548
        %v570 = vpack.c.bf16 %v551, %v550
        %v571 = vpack.c.bf16 %v553, %v552
        %v572 = vpack.c.bf16 %v555, %v554
        %v573 = vpack.c.bf16 %v557, %v556
        %v590 = vunpack.c.l.b16 %v558
        %v591 = vunpack.c.h.b16 %v558
        %v592 = vunpack.c.l.b16 %v559
        %v593 = vunpack.c.h.b16 %v559
        %v594 = vunpack.c.l.b16 %v560
        %v595 = vunpack.c.h.b16 %v560
        %v596 = vunpack.c.l.b16 %v561
        %v597 = vunpack.c.h.b16 %v561
        %v598 = vunpack.c.l.b16 %v562
        %v599 = vunpack.c.h.b16 %v562
        %v600 = vunpack.c.l.b16 %v563
        %v601 = vunpack.c.h.b16 %v563
        %v602 = vunpack.c.l.b16 %v564
        %v603 = vunpack.c.h.b16 %v564
        %v604 = vunpack.c.l.b16 %v565
        %v605 = vunpack.c.h.b16 %v565
        %v606 = vunpack.c.l.b16 %v566
        %v607 = vunpack.c.h.b16 %v566
        %v608 = vunpack.c.l.b16 %v567
        %v609 = vunpack.c.h.b16 %v567
        %v610 = vunpack.c.l.b16 %v568
        %v611 = vunpack.c.h.b16 %v568
        %v612 = vunpack.c.l.b16 %v569
        %v613 = vunpack.c.h.b16 %v569
        %v614 = vunpack.c.l.b16 %v570
        %v615 = vunpack.c.h.b16 %v570
        %v616 = vunpack.c.l.b16 %v571
        %v617 = vunpack.c.h.b16 %v571
        %v618 = vunpack.c.l.b16 %v572
        %v619 = vunpack.c.h.b16 %v572
        %v620 = vunpack.c.l.b16 %v573
        %v621 = vunpack.c.h.b16 %v573
        %v622 = vpack.c.b16 %v590, %v590
        %v623 = vpack.c.b16 %v591, %v591
        %v624 = vpack.c.b16 %v592, %v592
        %v625 = vpack.c.b16 %v593, %v593
        %v626 = vpack.c.b16 %v594, %v594
        %v627 = vpack.c.b16 %v595, %v595
        %v628 = vpack.c.b16 %v596, %v596
        %v629 = vpack.c.b16 %v597, %v597
        %v630 = vpack.c.b16 %v598, %v598
        %v631 = vpack.c.b16 %v599, %v599
        %v632 = vpack.c.b16 %v600, %v600
        %v633 = vpack.c.b16 %v601, %v601
        %v634 = vpack.c.b16 %v602, %v602
        %v635 = vpack.c.b16 %v603, %v603
        %v636 = vpack.c.b16 %v604, %v604
        %v637 = vpack.c.b16 %v605, %v605
        %v638 = vpack.c.b16 %v606, %v606
        %v639 = vpack.c.b16 %v607, %v607
        %v640 = vpack.c.b16 %v608, %v608
        %v641 = vpack.c.b16 %v609, %v609
        %v642 = vpack.c.b16 %v610, %v610
        %v643 = vpack.c.b16 %v611, %v611
        %v644 = vpack.c.b16 %v612, %v612
        %v645 = vpack.c.b16 %v613, %v613
        %v646 = vpack.c.b16 %v614, %v614
        %v647 = vpack.c.b16 %v615, %v615
        %v648 = vpack.c.b16 %v616, %v616
        %v649 = vpack.c.b16 %v617, %v617
        %v650 = vpack.c.b16 %v618, %v618
        %v651 = vpack.c.b16 %v619, %v619
        %v652 = vpack.c.b16 %v620, %v620
        %v653 = vpack.c.b16 %v621, %v621
        %vm686 = vcmask 519168
        %687 = vst.msk [vmem:[%s177] sm:$0xf] %vm686, %v622
        %688 = vst.msk [vmem:[%s177 + $0x4] sm:$0xf] %vm686, %v623
        %689 = vst.msk [vmem:[%s177 + $0x8] sm:$0xf] %vm686, %v624
        %690 = vst.msk [vmem:[%s177 + $0xc] sm:$0xf] %vm686, %v625
        %691 = vst.msk [vmem:[%s177 + $0x10] sm:$0xf] %vm686, %v626
        %692 = vst.msk [vmem:[%s177 + $0x14] sm:$0xf] %vm686, %v627
        %693 = vst.msk [vmem:[%s177 + $0x18] sm:$0xf] %vm686, %v628
        %694 = vst.msk [vmem:[%s177 + $0x1c] sm:$0xf] %vm686, %v629
        %695 = vst.msk [vmem:[%s177 + $0x20] sm:$0xf] %vm686, %v630
        %696 = vst.msk [vmem:[%s177 + $0x24] sm:$0xf] %vm686, %v631
        %697 = vst.msk [vmem:[%s177 + $0x28] sm:$0xf] %vm686, %v632
        %698 = vst.msk [vmem:[%s177 + $0x2c] sm:$0xf] %vm686, %v633
        %699 = vst.msk [vmem:[%s177 + $0x30] sm:$0xf] %vm686, %v634
        %700 = vst.msk [vmem:[%s177 + $0x34] sm:$0xf] %vm686, %v635
        %701 = vst.msk [vmem:[%s177 + $0x38] sm:$0xf] %vm686, %v636
        %702 = vst.msk [vmem:[%s177 + $0x3c] sm:$0xf] %vm686, %v637
        %703 = vst.msk [vmem:[%s177 + $0x40] sm:$0xf] %vm686, %v638
        %704 = vst.msk [vmem:[%s177 + $0x44] sm:$0xf] %vm686, %v639
        %705 = vst.msk [vmem:[%s177 + $0x48] sm:$0xf] %vm686, %v640
        %706 = vst.msk [vmem:[%s177 + $0x4c] sm:$0xf] %vm686, %v641
        %707 = vst.msk [vmem:[%s177 + $0x50] sm:$0xf] %vm686, %v642
        %708 = vst.msk [vmem:[%s177 + $0x54] sm:$0xf] %vm686, %v643
        %709 = vst.msk [vmem:[%s177 + $0x58] sm:$0xf] %vm686, %v644
        %710 = vst.msk [vmem:[%s177 + $0x5c] sm:$0xf] %vm686, %v645
        %711 = vst.msk [vmem:[%s177 + $0x60] sm:$0xf] %vm686, %v646
        %712 = vst.msk [vmem:[%s177 + $0x64] sm:$0xf] %vm686, %v647
        %713 = vst.msk [vmem:[%s177 + $0x68] sm:$0xf] %vm686, %v648
        %714 = vst.msk [vmem:[%s177 + $0x6c] sm:$0xf] %vm686, %v649
        %715 = vst.msk [vmem:[%s177 + $0x70] sm:$0xf] %vm686, %v650
        %716 = vst.msk [vmem:[%s177 + $0x74] sm:$0xf] %vm686, %v651
        %717 = vst.msk [vmem:[%s177 + $0x78] sm:$0xf] %vm686, %v652
        %718 = vst.msk [vmem:[%s177 + $0x7c] sm:$0xf] %vm686, %v653
        %s719 = sand.u32 %s107, 1
        %s720 = scalar_lea.sflag [#allocation3], %s719
        %s721 = sand.u32 %s107, 1
        %s722 = smul.addr %s721, 128
        %s723 = scalar_lea.vmem [#allocation2], %s722
        // Predicated region
        $region33: #{tpu_custom_call.1} parent=31 // pred_check
          %p724 = pneg %p117
        $region34: #{tpu_custom_call.1} parent=31 // pred_check_branch
          %726 = sbr.rel (%p724) target = $region36
        $region35: #{tpu_custom_call.1} parent=31 // pred_region
          %s727 = smul.u32 16, %s22
          %s729 = ssub.s32 2048, 2048
          %730 = vsyncadd %s720, %s729
          %s731 = smul.addr %s727, 2
          %s732 = smul.addr %s21, 32
          %s733 = sadd.s32 %s731, %s732
          %s734 = smul.addr %s733, 64
          %s735 = scalar_lea.hbm %s3, %s734
          %s736 = sshll.u32 %s723, 4
          %s737 = int_to_ptr.vmem [resolvable:$true] %s736
          %742 = dma.vmem_to_hbm [thread:$0]  %s737, 2048, %s735, %s720, 64, 64, 4
        $region36: #{tpu_custom_call.1} parent=31 // pred_fallthru
          _
      $region32: #{tpu_custom_call.1} parent=5 // pred_fallthru
        _
      %p743 = scmp.le.s32.totalorder 2, %s12
      // Predicated region
      $region37: #{tpu_custom_call.1} parent=5 // pred_check
        %p744 = pneg %p743
      $region38: #{tpu_custom_call.1} parent=5 // pred_check_branch
        %746 = sbr.rel (%p744) target = $region40
      $region39: #{tpu_custom_call.1} parent=5 // pred_region
        %s747 = ssub.s32 %s12, 2
        // Predicated region
        $region41: #{tpu_custom_call.1} parent=39 // pred_check
          %p748 = pneg %p123
        $region42: #{tpu_custom_call.1} parent=39 // pred_check_branch
          %750 = sbr.rel (%p748) target = $region44
        $region43: #{tpu_custom_call.1} parent=39 // pred_region
          %s751 = sand.u32 %s108, 1
          %s752 = scalar_lea.sflag [#allocation3], %s751
          %s753 = sand.u32 %s108, 1
          %s754 = smul.addr %s753, 128
          %s755 = scalar_lea.vmem [#allocation2], %s754
          %756 = dma.done %s752, 2048
        $region44: #{tpu_custom_call.1} parent=39 // pred_fallthru
          _
      $region40: #{tpu_custom_call.1} parent=5 // pred_fallthru
        _
    $region6: #{tpu_custom_call.1} parent=1 // loop_footer
      %s16 = sadd.s32 1, %s12
    $region7: #{tpu_custom_call.1} parent=1 // loop_footer_branch
      %11 = sbr.rel target = $region3
    $region8: #{tpu_custom_call.1} parent=1 // loop_exit
      _
    %757 = vsyncpa [#allocation3], 1
    %s758 = scalar_lea.sflag [#allocation3], 1
    %759 = vsyncpa %s758, 1

</llo_original>
